<compile_context>
chip_gen: v6e
topology: v6e:2x2x1
jax: 0.10.0
libtpu: 0.0.40
codegen_flags: <defaults>
</compile_context>

<pallas_src>
import functools

import jax
import jax.numpy as jnp
from jax.experimental import pallas as pl
from jax.experimental.pallas import tpu as pltpu


def _attention_block_kernel(x_ref, wgtp_ref, bgtp_ref, ww_ref, bw_ref, out_ref,
                            *, K):
    x = x_ref[...].astype(jnp.float32)                              # (tb, C)

    # Fused g / theta / phi projection: one (tb, C) @ (C, KP) MXU matmul.
    xm = x.astype(wgtp_ref.dtype)
    proj = jnp.dot(xm, wgtp_ref[...],
                   preferred_element_type=jnp.float32) + bgtp_ref[...]  # (tb, KP)
    g = proj[:, 0 * K:1 * K]                                        # (tb, K)
    t = proj[:, 1 * K:2 * K]                                        # (tb, K)
    p = proj[:, 2 * K:3 * K]                                        # (tb, K)

    # Row-max of f[b,i,j] = p[b,i]*t[b,j] without materializing f:
    # multiplication by a scalar is monotone, so max_j f = p*t_max (p>=0)
    # or p*t_min (p<0).  Bit-exact vs. a max over the full row.
    t_max = jnp.max(t, axis=-1, keepdims=True)                      # (tb, 1)
    t_min = jnp.min(t, axis=-1, keepdims=True)                      # (tb, 1)
    f_max = jnp.where(p >= 0.0, p * t_max, p * t_min)               # (tb, K)

    # Un-normalized softmax weights; fuse numerator and denominator so no
    # (tb, K, K) divide is ever materialized.
    e = jnp.exp(p[:, :, None] * t[:, None, :] - f_max[:, :, None])  # (tb, K, K)
    num = jnp.sum(e * g[:, None, :], axis=-1)                       # (tb, K)
    den = jnp.sum(e, axis=-1)                                       # (tb, K)

    # y = num / den via EUP approx reciprocal + one Newton step (f32-accurate).
    inv = pl.reciprocal(den, approx=True)
    inv = inv * (2.0 - den * inv)
    y = num * inv                                                   # (tb, K)

    # Output projection K -> C plus residual (residual stays f32).
    wy = jnp.dot(y.astype(ww_ref.dtype), ww_ref[...],
                 preferred_element_type=jnp.float32) + bw_ref[...]  # (tb, C)
    out_ref[...] = (wy + x).astype(out_ref.dtype)


def _default_tb(B, K):
    """Batch tile: multiple of 8, divides B, keeps one (tb,K,K) f32 tensor
    around <=32 vregs, and gives the grid several steps for pipelining and
    v7x megacore sharding."""
    if B <= 8:
        return B
    cap = max(8, ((32 * 1024) // max(K * K, 1)) // 8 * 8)
    want = max(8, (B // 4) // 8 * 8)          # aim for >= 4 grid steps
    tb = min(B, cap, want)
    while tb > 8 and B % tb != 0:
        tb -= 8
    return tb if B % tb == 0 else B
    # NOTE: for very large C (K*K*8*4B >> VMEM) an inner fori_loop over row
    # chunks of the f/e tensor would be added; not needed at these sizes.


def attention_block(x, params, *, tb=None, use_bf16=False):
    """params = (wg, bg, wt, bt, wp, bp, ww, bw) in PyTorch nn.Linear layout
    (weight: (out, in), bias: (out,))."""
    B, C = x.shape
    assert C % 8 == 0, "in_channels must be divisible by 8"
    K = C // 8

    if tb is None:
        tb = _default_tb(B, K)
    assert B % tb == 0, f"tb={tb} must divide B={B}"
    assert tb == B or tb % 8 == 0, f"tb={tb} must be a multiple of 8 (or == B)"

    wg, bg, wt, bt, wp, bp, ww, bw = params

    # Fuse the three C->K projections into a single (C, KP) weight / (1, KP)
    # bias, zero-padded so the matmul N-dim is a full multiple of 128 lanes.
    KP = max(128, ((3 * K + 127) // 128) * 128)
    pad = KP - 3 * K
    w_dtype = jnp.bfloat16 if use_bf16 else jnp.float32
    w_cols = [wg.T, wt.T, wp.T]
    b_cols = [bg, bt, bp]
    if pad:
        w_cols.append(jnp.zeros((C, pad), jnp.float32))
        b_cols.append(jnp.zeros((pad,), jnp.float32))
    w_gtp = jnp.concatenate(w_cols, axis=1).astype(w_dtype)        # (C, KP)
    b_gtp = jnp.concatenate(b_cols)[None, :].astype(jnp.float32)   # (1, KP)
    ww_t = ww.T.astype(w_dtype)                                    # (K, C)
    bw2 = bw[None, :].astype(jnp.float32)                          # (1, C)

    grid = (B // tb,)
    const = lambda i: (0, 0)
    kernel = functools.partial(_attention_block_kernel, K=K)

    return pl.pallas_call(
        kernel,
        out_shape=jax.ShapeDtypeStruct((B, C), x.dtype),
        grid_spec=pltpu.PrefetchScalarGridSpec(
            num_scalar_prefetch=0,
            grid=grid,
            in_specs=[
                pl.BlockSpec((tb, C), lambda i: (i, 0)),   # x tile
                pl.BlockSpec((C, KP), const),              # fused [Wg|Wt|Wp]^T
                pl.BlockSpec((1, KP), const),              # fused [bg|bt|bp]
                pl.BlockSpec((K, C), const),               # Ww^T
                pl.BlockSpec((1, C), const),               # bw
            ],
            out_specs=pl.BlockSpec((tb, C), lambda i: (i, 0)),
        ),
        compiler_params=pltpu.CompilerParams(
            dimension_semantics=("parallel",)),
    )(x, w_gtp, b_gtp, ww_t, bw2)


def init_params(key, in_channels):
    """PyTorch-Linear-style init: U(-1/sqrt(fan_in), 1/sqrt(fan_in))."""
    K = in_channels // 8
    ks = jax.random.split(key, 8)

    def lin(kw, kb, fan_in, fan_out):
        bound = 1.0 / jnp.sqrt(fan_in)
        w = jax.random.uniform(kw, (fan_out, fan_in), jnp.float32, -bound, bound)
        b = jax.random.uniform(kb, (fan_out,), jnp.float32, -bound, bound)
        return w, b

    wg, bg = lin(ks[0], ks[1], in_channels, K)
    wt, bt = lin(ks[2], ks[3], in_channels, K)
    wp, bp = lin(ks[4], ks[5], in_channels, K)
    ww, bw = lin(ks[6], ks[7], K, in_channels)
    return (wg, bg, wt, bt, wp, bp, ww, bw)


def reference(x, params):
    """Plain-JAX replica of the PyTorch forward for correctness checking."""
    wg, bg, wt, bt, wp, bp, ww, bw = params
    g = x @ wg.T + bg
    t = x @ wt.T + bt
    p = x @ wp.T + bp
    f = p[:, :, None] * t[:, None, :]
    sm = jax.nn.softmax(f, axis=-1)
    y = jnp.einsum('bij,bj->bi', sm, g)
    return y @ ww.T + bw + x


if __name__ == "__main__":
    # Larger batch so the kernel actually exercises a multi-step parallel grid
    # (pipelining + v7x megacore); still a small problem overall.
    B, C = 64, 256        # in_channels divisible by 8 -> K = 32
    key = jax.random.PRNGKey(0)
    kx, kp = jax.random.split(key)
    x = jax.random.normal(kx, (B, C), jnp.float32)
    params = init_params(kp, C)

    out = attention_block(x, params)     # default tb -> 16, grid = (4,)
    out = jax.block_until_ready(out)

    ref = reference(x, params)
    assert out.shape == (B, C) and out.dtype == jnp.float32
    assert jnp.allclose(out, ref, atol=1e-4, rtol=1e-4), "mismatch vs reference"
    print("KERNEL_OK")
</pallas_src>

<mosaic_0001>
module attributes {stable_mosaic.version = 11 : i64} {
  func.func @_attention_block_kernel(%arg0: i32, %arg1: memref<16x256xf32, #tpu.memory_space<vmem>>, %arg2: memref<256x128xf32, #tpu.memory_space<vmem>>, %arg3: memref<1x128xf32, #tpu.memory_space<vmem>>, %arg4: memref<32x256xf32, #tpu.memory_space<vmem>>, %arg5: memref<1x256xf32, #tpu.memory_space<vmem>>, %arg6: memref<16x256xf32, #tpu.memory_space<vmem>>) attributes {dimension_semantics = [#tpu.dimension_semantics<parallel>], iteration_bounds = array<i64: 4>, scalar_prefetch = 0 : i64, scratch_operands = 0 : i64, tpu.core_type = #tpu.core_type<tc>, window_params = [{transform_indices = @transform_0, window_bounds = array<i64: 16, 256>}, {pipeline_mode = #tpu.pipeline_mode<synchronous>, transform_indices = @transform_1, window_bounds = array<i64: 256, 128>}, {pipeline_mode = #tpu.pipeline_mode<synchronous>, transform_indices = @transform_2, window_bounds = array<i64: 1, 128>}, {pipeline_mode = #tpu.pipeline_mode<synchronous>, transform_indices = @transform_3, window_bounds = array<i64: 32, 256>}, {pipeline_mode = #tpu.pipeline_mode<synchronous>, transform_indices = @transform_4, window_bounds = array<i64: 1, 256>}, {transform_indices = @transform_5, window_bounds = array<i64: 16, 256>}]} {
    %c0 = arith.constant 0 : index
    %c0_0 = arith.constant 0 : index
    %0 = vector.load %arg1[%c0, %c0_0] : memref<16x256xf32, #tpu.memory_space<vmem>>, vector<16x256xf32>
    %c0_1 = arith.constant 0 : index
    %c0_2 = arith.constant 0 : index
    %1 = vector.load %arg2[%c0_1, %c0_2] : memref<256x128xf32, #tpu.memory_space<vmem>>, vector<256x128xf32>
    %cst = arith.constant dense<0.000000e+00> : vector<16x128xf32>
    %2 = tpu.matmul %0, %1, %cst {dimension_numbers = #tpu.dot_dimension_numbers<[1], [0], [0], [1], [0, 0, 1, 1], [], []>} : vector<16x256xf32>, vector<256x128xf32>, vector<16x128xf32> -> vector<16x128xf32>
    %c0_3 = arith.constant 0 : index
    %c0_4 = arith.constant 0 : index
    %3 = vector.load %arg3[%c0_3, %c0_4] : memref<1x128xf32, #tpu.memory_space<vmem>>, vector<1x128xf32>
    %4 = vector.broadcast %3 : vector<1x128xf32> to vector<16x128xf32>
    %5 = arith.addf %2, %4 : vector<16x128xf32>
    %6 = vector.extract_strided_slice %5 {offsets = [0, 0], sizes = [16, 32], strides = [1, 1]} : vector<16x128xf32> to vector<16x32xf32>
    %7 = vector.extract_strided_slice %5 {offsets = [0, 32], sizes = [16, 32], strides = [1, 1]} : vector<16x128xf32> to vector<16x32xf32>
    %8 = vector.extract_strided_slice %5 {offsets = [0, 64], sizes = [16, 32], strides = [1, 1]} : vector<16x128xf32> to vector<16x32xf32>
    %cst_5 = arith.constant dense<0xFF800000> : vector<16xf32>
    %9 = vector.multi_reduction <maximumf>, %7, %cst_5 [1] : vector<16x32xf32> to vector<16xf32>
    %10 = vector.shape_cast %9 : vector<16xf32> to vector<16x1xf32>
    %cst_6 = arith.constant dense<0x7F800000> : vector<16xf32>
    %11 = vector.multi_reduction <minimumf>, %7, %cst_6 [1] : vector<16x32xf32> to vector<16xf32>
    %12 = vector.shape_cast %11 : vector<16xf32> to vector<16x1xf32>
    %cst_7 = arith.constant 0.000000e+00 : f32
    %13 = vector.broadcast %cst_7 : f32 to vector<16x32xf32>
    %14 = arith.cmpf oge, %8, %13 : vector<16x32xf32>
    %15 = vector.broadcast %10 : vector<16x1xf32> to vector<16x32xf32>
    %16 = arith.mulf %8, %15 : vector<16x32xf32>
    %17 = vector.broadcast %12 : vector<16x1xf32> to vector<16x32xf32>
    %18 = arith.mulf %8, %17 : vector<16x32xf32>
    %19 = arith.select %14, %16, %18 : vector<16x32xi1>, vector<16x32xf32>
    %20 = vector.shape_cast %8 : vector<16x32xf32> to vector<16x32x1xf32>
    %21 = vector.shape_cast %7 : vector<16x32xf32> to vector<16x1x32xf32>
    %22 = vector.broadcast %20 : vector<16x32x1xf32> to vector<16x32x32xf32>
    %23 = vector.broadcast %21 : vector<16x1x32xf32> to vector<16x32x32xf32>
    %24 = arith.mulf %22, %23 : vector<16x32x32xf32>
    %25 = vector.shape_cast %19 : vector<16x32xf32> to vector<16x32x1xf32>
    %26 = vector.broadcast %25 : vector<16x32x1xf32> to vector<16x32x32xf32>
    %27 = arith.subf %24, %26 : vector<16x32x32xf32>
    %28 = math.exp %27 : vector<16x32x32xf32>
    %29 = vector.shape_cast %6 : vector<16x32xf32> to vector<16x1x32xf32>
    %30 = vector.broadcast %29 : vector<16x1x32xf32> to vector<16x32x32xf32>
    %31 = arith.mulf %28, %30 : vector<16x32x32xf32>
    %cst_8 = arith.constant dense<0.000000e+00> : vector<16x32xf32>
    %32 = vector.multi_reduction <add>, %31, %cst_8 [2] : vector<16x32x32xf32> to vector<16x32xf32>
    %cst_9 = arith.constant dense<0.000000e+00> : vector<16x32xf32>
    %33 = vector.multi_reduction <add>, %28, %cst_9 [2] : vector<16x32x32xf32> to vector<16x32xf32>
    %34 = tpu.reciprocal %33 {approx = true} : vector<16x32xf32> -> vector<16x32xf32>
    %35 = arith.mulf %33, %34 : vector<16x32xf32>
    %cst_10 = arith.constant 2.000000e+00 : f32
    %36 = vector.broadcast %cst_10 : f32 to vector<16x32xf32>
    %37 = arith.subf %36, %35 : vector<16x32xf32>
    %38 = arith.mulf %34, %37 : vector<16x32xf32>
    %39 = arith.mulf %32, %38 : vector<16x32xf32>
    %c0_11 = arith.constant 0 : index
    %c0_12 = arith.constant 0 : index
    %40 = vector.load %arg4[%c0_11, %c0_12] : memref<32x256xf32, #tpu.memory_space<vmem>>, vector<32x256xf32>
    %cst_13 = arith.constant dense<0.000000e+00> : vector<16x256xf32>
    %41 = tpu.matmul %39, %40, %cst_13 {dimension_numbers = #tpu.dot_dimension_numbers<[1], [0], [0], [1], [0, 0, 1, 1], [], []>} : vector<16x32xf32>, vector<32x256xf32>, vector<16x256xf32> -> vector<16x256xf32>
    %c0_14 = arith.constant 0 : index
    %c0_15 = arith.constant 0 : index
    %42 = vector.load %arg5[%c0_14, %c0_15] : memref<1x256xf32, #tpu.memory_space<vmem>>, vector<1x256xf32>
    %43 = vector.broadcast %42 : vector<1x256xf32> to vector<16x256xf32>
    %44 = arith.addf %41, %43 : vector<16x256xf32>
    %45 = arith.addf %44, %0 : vector<16x256xf32>
    %c0_16 = arith.constant 0 : index
    %c0_17 = arith.constant 0 : index
    %46 = vector.load %arg6[%c0_16, %c0_17] : memref<16x256xf32, #tpu.memory_space<vmem>>, vector<16x256xf32>
    tpu.vector_store %arg6[%c0_16, %c0_17], %45 {strides = array<i32>} : memref<16x256xf32, #tpu.memory_space<vmem>>, vector<16x256xf32>,
    return
  }
  func.func @transform_0(%arg0: i32) -> (i32, i32) {
    %c0_i32 = arith.constant 0 : i32
    %c0_i32_0 = arith.constant 0 : i32
    return %arg0, %c0_i32 : i32, i32
  }
  func.func @transform_1(%arg0: i32) -> (i32, i32) {
    %c0_i32 = arith.constant 0 : i32
    %c0_i32_0 = arith.constant 0 : i32
    %c0_i32_1 = arith.constant 0 : i32
    return %c0_i32, %c0_i32_0 : i32, i32
  }
  func.func @transform_2(%arg0: i32) -> (i32, i32) {
    %c0_i32 = arith.constant 0 : i32
    %c0_i32_0 = arith.constant 0 : i32
    %c0_i32_1 = arith.constant 0 : i32
    return %c0_i32, %c0_i32_0 : i32, i32
  }
  func.func @transform_3(%arg0: i32) -> (i32, i32) {
    %c0_i32 = arith.constant 0 : i32
    %c0_i32_0 = arith.constant 0 : i32
    %c0_i32_1 = arith.constant 0 : i32
    return %c0_i32, %c0_i32_0 : i32, i32
  }
  func.func @transform_4(%arg0: i32) -> (i32, i32) {
    %c0_i32 = arith.constant 0 : i32
    %c0_i32_0 = arith.constant 0 : i32
    %c0_i32_1 = arith.constant 0 : i32
    return %c0_i32, %c0_i32_0 : i32, i32
  }
  func.func @transform_5(%arg0: i32) -> (i32, i32) {
    %c0_i32 = arith.constant 0 : i32
    %c0_i32_0 = arith.constant 0 : i32
    return %arg0, %c0_i32 : i32, i32
  }
}

</mosaic_0001>

<llo_original>
// kernel: tpu_custom_call.1
$region0: #{tpu_custom_call.1}
  #allocation0 [shape = 'u32[]', space=smem, size = 0x4, offset = 0x4, fixed_abs, tag = 'smem constant byte address 0x4 - core index']
  #allocation1 [shape = 'u32[144,128]{1,0:T(1,128)}', space=vmem, size = 0x12000, scoped, tag = 'internal scratch']
  %s0 = inlined_call_operand.hbm [shape: f32[64,256], index: 0, kind: input, shape index: {}]
  %s1 = inlined_call_operand.hbm [shape: f32[256,128], index: 1, kind: input, shape index: {}]
  %s2 = inlined_call_operand.vmem [shape: f32[1,128], index: 2, kind: input, shape index: {}]
  %s3 = inlined_call_operand.hbm [shape: f32[32,256], index: 3, kind: input, shape index: {}]
  %s4 = inlined_call_operand.vmem [shape: f32[1,256], index: 4, kind: input, shape index: {}]
  %s5 = inlined_call_operand.hbm [shape: f32[64,256], index: 5, kind: output, shape index: {}]
  %s6 = sld [smem:[#allocation0]]
  $region65: #{tpu_custom_call.1} parent=0
    _
  %s8 = ssub.s32 1, %s6
  %s9 = scalar_select 0, %s8, %s6
  $region1: #{tpu_custom_call.1} parent=0
    #allocation2 [shape = 'u8[32768]{0}', space=vmem, size = 0x8000, scoped, tag = 'input window, operand 0']
    #allocation3 [shape = 's32[2]{0}', space=sflag, size = 0x8, scoped, tag = 'scoped memory for tpu_custom_call.1']
    #allocation4 [shape = 's32[2]{0}', space=sflag, size = 0x8, scoped, tag = 'scoped memory for tpu_custom_call.1']
    #allocation5 [shape = 'u8[131072]{0}', space=vmem, size = 0x20000, scoped, tag = 'input window, operand 1, single buffered']
    #allocation6 [shape = 's32[1]{0}', space=sflag, size = 0x4, scoped, tag = 'scoped memory for tpu_custom_call.1']
    #allocation7 [shape = 'u8[32768]{0}', space=vmem, size = 0x8000, scoped, tag = 'input window, operand 3, single buffered']
    #allocation8 [shape = 'u8[32768]{0}', space=vmem, size = 0x8000, scoped, tag = 'output window, operand 0']
    %10 = vsyncpa [#allocation3], 0
    %s11 = scalar_lea.sflag [#allocation3], 1
    %12 = vsyncpa %s11, 0
    %13 = vsyncpa [#allocation6], 0
    %14 = vsyncpa [#allocation4], 0
    %s15 = scalar_lea.sflag [#allocation4], 1
    %16 = vsyncpa %s15, 0
    loop: start=0, step=1, limit=6
    $region2: #{tpu_custom_call.1} parent=1 // loop_pre_header
      _
    $region3: #{tpu_custom_call.1} parent=1 // loop_header
      %s18 = sphi 0, %s22
      %p19 = scmp.ge.s32.totalorder %s18, 6
      %s28 = sphi 0, %s30
      %s31 = sphi 0, %s28
      %s32 = sphi 0, %s31
      %s48 = sphi 0, %s32
      %s52 = sphi 0, %s52
      %s54 = sphi 0, %s52
      %s55 = sphi 0, %s54
      %s69 = sphi 0, %s55
      %s73 = sphi 0, %s73
      %s75 = sphi 0, %s73
      %s76 = sphi 0, %s75
      %s90 = sphi 0, %s76
      %s94 = sphi 0, %s94
      %s96 = sphi 0, %s94
      %s97 = sphi 0, %s96
      %s111 = sphi 0, %s97
      %s115 = sphi 0, %s115
      %s117 = sphi 0, %s115
      %s118 = sphi 0, %s117
      %s132 = sphi 0, %s118
      %s138 = sphi 0, %s140
      %s141 = sphi 0, %s138
      %s142 = sphi 0, %s141
      %s158 = sphi 0, %s142
    $region4: #{tpu_custom_call.1} parent=1 // loop_header_branch
      %21 = sbr.rel (%p19) target = $region8
    $region5: #{tpu_custom_call.1} parent=1 // loop_body
      %s23 = ssub.s32 %s18, 1
      %s24 = ssub.s32 %s18, 2
      %s25 = sadd.s32 %s18, 1
      %s26 = ssub.s32 %s18, %s25
      %p27 = scmp.eq.s32.totalorder %s26, 0
      %s29 = sadd.s32 %s28, 1
      %s30 = scalar_select %p27, %s28, %s29
      %p33 = pneg %p27
      %p34 = scmp.eq.s32.totalorder %s18, 3
      %p35 = por %p33, %p34
      %p36 = scmp.ne.s32.totalorder %s28, %s31
      %p37 = scmp.eq.s32.totalorder %s18, 0
      %p38 = por %p36, %p37
      %p39 = scmp.ne.s32.totalorder %s28, %s31
      %p40 = scmp.eq.s32.totalorder %s23, 3
      %p41 = por %p39, %p40
      %p42 = scmp.ne.s32.totalorder %s31, %s32
      %p43 = scmp.eq.s32.totalorder %s23, 0
      %p44 = por %p42, %p43
      %p45 = scmp.ne.s32.totalorder %s31, %s32
      %p46 = scmp.eq.s32.totalorder %s24, 3
      %p47 = por %p45, %p46
      %p49 = scmp.ne.s32.totalorder %s32, %s48
      %p50 = scmp.eq.s32.totalorder %s24, 0
      %p51 = por %p49, %p50
      %s53 = sadd.s32 %s52, 1
      %p56 = scmp.eq.s32.totalorder %s18, 3
      %p57 = scmp.ne.s32.totalorder %s52, %s54
      %p58 = scmp.eq.s32.totalorder %s18, 0
      %p59 = por %p57, %p58
      %p60 = scmp.ne.s32.totalorder %s52, %s54
      %p61 = scmp.eq.s32.totalorder %s23, 3
      %p62 = por %p60, %p61
      %p63 = scmp.ne.s32.totalorder %s54, %s55
      %p64 = scmp.eq.s32.totalorder %s23, 0
      %p65 = por %p63, %p64
      %p66 = scmp.ne.s32.totalorder %s54, %s55
      %p67 = scmp.eq.s32.totalorder %s24, 3
      %p68 = por %p66, %p67
      %p70 = scmp.ne.s32.totalorder %s55, %s69
      %p71 = scmp.eq.s32.totalorder %s24, 0
      %p72 = por %p70, %p71
      %s74 = sadd.s32 %s73, 1
      %p77 = scmp.eq.s32.totalorder %s18, 3
      %p78 = scmp.ne.s32.totalorder %s73, %s75
      %p79 = scmp.eq.s32.totalorder %s18, 0
      %p80 = por %p78, %p79
      %p81 = scmp.ne.s32.totalorder %s73, %s75
      %p82 = scmp.eq.s32.totalorder %s23, 3
      %p83 = por %p81, %p82
      %p84 = scmp.ne.s32.totalorder %s75, %s76
      %p85 = scmp.eq.s32.totalorder %s23, 0
      %p86 = por %p84, %p85
      %p87 = scmp.ne.s32.totalorder %s75, %s76
      %p88 = scmp.eq.s32.totalorder %s24, 3
      %p89 = por %p87, %p88
      %p91 = scmp.ne.s32.totalorder %s76, %s90
      %p92 = scmp.eq.s32.totalorder %s24, 0
      %p93 = por %p91, %p92
      %s95 = sadd.s32 %s94, 1
      %p98 = scmp.eq.s32.totalorder %s18, 3
      %p99 = scmp.ne.s32.totalorder %s94, %s96
      %p100 = scmp.eq.s32.totalorder %s18, 0
      %p101 = por %p99, %p100
      %p102 = scmp.ne.s32.totalorder %s94, %s96
      %p103 = scmp.eq.s32.totalorder %s23, 3
      %p104 = por %p102, %p103
      %p105 = scmp.ne.s32.totalorder %s96, %s97
      %p106 = scmp.eq.s32.totalorder %s23, 0
      %p107 = por %p105, %p106
      %p108 = scmp.ne.s32.totalorder %s96, %s97
      %p109 = scmp.eq.s32.totalorder %s24, 3
      %p110 = por %p108, %p109
      %p112 = scmp.ne.s32.totalorder %s97, %s111
      %p113 = scmp.eq.s32.totalorder %s24, 0
      %p114 = por %p112, %p113
      %s116 = sadd.s32 %s115, 1
      %p119 = scmp.eq.s32.totalorder %s18, 3
      %p120 = scmp.ne.s32.totalorder %s115, %s117
      %p121 = scmp.eq.s32.totalorder %s18, 0
      %p122 = por %p120, %p121
      %p123 = scmp.ne.s32.totalorder %s115, %s117
      %p124 = scmp.eq.s32.totalorder %s23, 3
      %p125 = por %p123, %p124
      %p126 = scmp.ne.s32.totalorder %s117, %s118
      %p127 = scmp.eq.s32.totalorder %s23, 0
      %p128 = por %p126, %p127
      %p129 = scmp.ne.s32.totalorder %s117, %s118
      %p130 = scmp.eq.s32.totalorder %s24, 3
      %p131 = por %p129, %p130
      %p133 = scmp.ne.s32.totalorder %s118, %s132
      %p134 = scmp.eq.s32.totalorder %s24, 0
      %p135 = por %p133, %p134
      %s136 = ssub.s32 %s18, %s25
      %p137 = scmp.eq.s32.totalorder %s136, 0
      %s139 = sadd.s32 %s138, 1
      %s140 = scalar_select %p137, %s138, %s139
      %p143 = pneg %p137
      %p144 = scmp.eq.s32.totalorder %s18, 3
      %p145 = por %p143, %p144
      %p146 = scmp.ne.s32.totalorder %s138, %s141
      %p147 = scmp.eq.s32.totalorder %s18, 0
      %p148 = por %p146, %p147
      %p149 = scmp.ne.s32.totalorder %s138, %s141
      %p150 = scmp.eq.s32.totalorder %s23, 3
      %p151 = por %p149, %p150
      %p152 = scmp.ne.s32.totalorder %s141, %s142
      %p153 = scmp.eq.s32.totalorder %s23, 0
      %p154 = por %p152, %p153
      %p155 = scmp.ne.s32.totalorder %s141, %s142
      %p156 = scmp.eq.s32.totalorder %s24, 3
      %p157 = por %p155, %p156
      %p159 = scmp.ne.s32.totalorder %s142, %s158
      %p160 = scmp.eq.s32.totalorder %s24, 0
      %p161 = por %p159, %p160
      %p162 = scmp.le.s32.totalorder 1, %s18
      %p163 = scmp.lt.s32.totalorder %s18, 5
      %p164 = pnand %p162, %p163
      %p165 = pneg %p164
      // Predicated region
      $region9: #{tpu_custom_call.1} parent=5 // pred_check
        _
      $region10: #{tpu_custom_call.1} parent=5 // pred_check_branch
        %167 = sbr.rel (%p164) target = $region12
      $region11: #{tpu_custom_call.1} parent=5 // pred_region
        %s168 = ssub.s32 %s18, 1
        // Predicated region
        $region13: #{tpu_custom_call.1} parent=11 // pred_check
          %p169 = pneg %p65
        $region14: #{tpu_custom_call.1} parent=11 // pred_check_branch
          %171 = sbr.rel (%p169) target = $region16
        $region15: #{tpu_custom_call.1} parent=11 // pred_region
          %s173 = ssub.s32 4096, 4096
          %174 = vsyncadd [#allocation6], %s173
          %s175 = sshll.u32 [#allocation5], 4
          %s176 = int_to_ptr.vmem [resolvable:$true] %s175
          %181 = dma.hbm_to_vmem [thread:$0]  %s1, 4096, %s176, [#allocation6], 128, 128, 8
        $region16: #{tpu_custom_call.1} parent=11 // pred_fallthru
          _
        // Predicated region
        $region17: #{tpu_custom_call.1} parent=11 // pred_check
          %p182 = pneg %p86
        $region18: #{tpu_custom_call.1} parent=11 // pred_check_branch
          %184 = sbr.rel (%p182) target = $region20
        $region19: #{tpu_custom_call.1} parent=11 // pred_region
          _
        $region20: #{tpu_custom_call.1} parent=11 // pred_fallthru
          _
        // Predicated region
        $region21: #{tpu_custom_call.1} parent=11 // pred_check
          %p185 = pneg %p107
        $region22: #{tpu_custom_call.1} parent=11 // pred_check_branch
          %187 = sbr.rel (%p185) target = $region24
        $region23: #{tpu_custom_call.1} parent=11 // pred_region
          %s189 = ssub.s32 1024, 1024
          %190 = vsyncadd [#allocation6], %s189
          %s191 = sshll.u32 [#allocation7], 4
          %s192 = int_to_ptr.vmem [resolvable:$true] %s191
          %197 = dma.hbm_to_vmem [thread:$0]  %s3, 1024, %s192, [#allocation6], 256, 256, 16
        $region24: #{tpu_custom_call.1} parent=11 // pred_fallthru
          _
        // Predicated region
        $region25: #{tpu_custom_call.1} parent=11 // pred_check
          %p198 = pneg %p128
        $region26: #{tpu_custom_call.1} parent=11 // pred_check_branch
          %200 = sbr.rel (%p198) target = $region28
        $region27: #{tpu_custom_call.1} parent=11 // pred_region
          _
        $region28: #{tpu_custom_call.1} parent=11 // pred_fallthru
          _
      $region12: #{tpu_custom_call.1} parent=5 // pred_fallthru
        _
      %p201 = scmp.lt.s32.totalorder %s18, 4
      // Predicated region
      $region29: #{tpu_custom_call.1} parent=5 // pred_check
        %p202 = pneg %p201
      $region30: #{tpu_custom_call.1} parent=5 // pred_check_branch
        %204 = sbr.rel (%p202) target = $region32
      $region31: #{tpu_custom_call.1} parent=5 // pred_region
        // Predicated region
        $region33: #{tpu_custom_call.1} parent=31 // pred_check
          %p205 = pneg %p38
        $region34: #{tpu_custom_call.1} parent=31 // pred_check_branch
          %207 = sbr.rel (%p205) target = $region36
        $region35: #{tpu_custom_call.1} parent=31 // pred_region
          %s208 = sand.u32 %s28, 1
          %s209 = scalar_lea.sflag [#allocation3], %s208
          %s210 = sand.u32 %s28, 1
          %s211 = smul.addr %s210, 32
          %s212 = scalar_lea.vmem [#allocation2], %s211
          %s213 = smul.u32 2, %s18
          %s215 = ssub.s32 512, 512
          %216 = vsyncadd %s209, %s215
          %s217 = smul.addr %s213, 2
          %s218 = smul.addr %s217, 128
          %s219 = scalar_lea.hbm %s0, %s218
          %s220 = sshll.u32 %s212, 4
          %s221 = int_to_ptr.vmem [resolvable:$true] %s220
          %226 = dma.hbm_to_vmem [thread:$0]  %s219, 512, %s221, %s209, 256, 256, 16
        $region36: #{tpu_custom_call.1} parent=31 // pred_fallthru
          _
      $region32: #{tpu_custom_call.1} parent=5 // pred_fallthru
        _
      %p227 = scmp.le.s32.totalorder 1, %s18
      %p228 = scmp.lt.s32.totalorder %s18, 5
      %p229 = pnand %p227, %p228
      %p230 = pneg %p229
      // Predicated region
      $region37: #{tpu_custom_call.1} parent=5 // pred_check
        _
      $region38: #{tpu_custom_call.1} parent=5 // pred_check_branch
        %232 = sbr.rel (%p229) target = $region40
      $region39: #{tpu_custom_call.1} parent=5 // pred_region
        %s233 = ssub.s32 %s18, 1
        %s234 = sand.u32 %s31, 1
        %s235 = scalar_lea.sflag [#allocation3], %s234
        %s236 = sand.u32 %s31, 1
        %s237 = smul.addr %s236, 32
        %s238 = scalar_lea.vmem [#allocation2], %s237
        // Predicated region
        $region41: #{tpu_custom_call.1} parent=39 // pred_check
          %p239 = pneg %p44
        $region42: #{tpu_custom_call.1} parent=39 // pred_check_branch
          %241 = sbr.rel (%p239) target = $region44
        $region43: #{tpu_custom_call.1} parent=39 // pred_region
          %242 = dma.done %s235, 512
        $region44: #{tpu_custom_call.1} parent=39 // pred_fallthru
          _
        // Predicated region
        $region45: #{tpu_custom_call.1} parent=39 // pred_check
          %p243 = pneg %p65
        $region46: #{tpu_custom_call.1} parent=39 // pred_check_branch
          %245 = sbr.rel (%p243) target = $region48
        $region47: #{tpu_custom_call.1} parent=39 // pred_region
          %246 = dma.done [#allocation6], 4096
        $region48: #{tpu_custom_call.1} parent=39 // pred_fallthru
          _
        // Predicated region
        $region49: #{tpu_custom_call.1} parent=39 // pred_check
          %p247 = pneg %p107
        $region50: #{tpu_custom_call.1} parent=39 // pred_check_branch
          %249 = sbr.rel (%p247) target = $region52
        $region51: #{tpu_custom_call.1} parent=39 // pred_region
          %250 = dma.done [#allocation6], 1024
        $region52: #{tpu_custom_call.1} parent=39 // pred_fallthru
          _
        %s251 = sand.u32 %s31, 1
        %s252 = scalar_lea.sflag [#allocation3], %s251
        %s253 = sand.u32 %s31, 1
        %s254 = smul.addr %s253, 32
        %s255 = scalar_lea.vmem [#allocation2], %s254
        %p256 = pneg %p44
        %p257 = pneg %p41
        %p258 = pneg %p65
        %p259 = pneg %p62
        %p260 = pneg %p86
        %p261 = pneg %p83
        %p262 = pneg %p107
        %p263 = pneg %p104
        %p264 = pneg %p128
        %p265 = pneg %p125
        %p266 = pneg %p154
        %p267 = pneg %p151
        %s268 = sand.u32 %s141, 1
        %s269 = scalar_lea.sflag [#allocation4], %s268
        %s270 = sand.u32 %s141, 1
        %s271 = smul.addr %s270, 32
        %s272 = scalar_lea.vmem [#allocation8], %s271
        %s273 = smul.u32 2, %s23
        %s274 = smul.u32 2, %s23
        %v275 = vld [vmem:[%s238] sm:$0xff]
        %v276 = vld [vmem:[%s238 + $0x8] sm:$0xff]
        %v277 = vld [vmem:[%s238 + $0x10] sm:$0xff]
        %v278 = vld [vmem:[%s238 + $0x18] sm:$0xff]
        %v279 = vld [vmem:[#allocation5] sm:$0xff]
        %v280 = vld [vmem:[#allocation5 + $0x8] sm:$0xff]
        %v281 = vld [vmem:[#allocation5 + $0x10] sm:$0xff]
        %v282 = vld [vmem:[#allocation5 + $0x18] sm:$0xff]
        %v283 = vld [vmem:[#allocation5 + $0x20] sm:$0xff]
        %v284 = vld [vmem:[#allocation5 + $0x28] sm:$0xff]
        %v285 = vld [vmem:[#allocation5 + $0x30] sm:$0xff]
        %v286 = vld [vmem:[#allocation5 + $0x38] sm:$0xff]
        %v287 = vld [vmem:[#allocation5 + $0x40] sm:$0xff]
        %v288 = vld [vmem:[#allocation5 + $0x48] sm:$0xff]
        %v289 = vld [vmem:[#allocation5 + $0x50] sm:$0xff]
        %v290 = vld [vmem:[#allocation5 + $0x58] sm:$0xff]
        %v291 = vld [vmem:[#allocation5 + $0x60] sm:$0xff]
        %v292 = vld [vmem:[#allocation5 + $0x68] sm:$0xff]
        %v293 = vld [vmem:[#allocation5 + $0x70] sm:$0xff]
        %v294 = vld [vmem:[#allocation5 + $0x78] sm:$0xff]
        %v295 = vld [vmem:[#allocation5 + $0x80] sm:$0xff]
        %v296 = vld [vmem:[#allocation5 + $0x88] sm:$0xff]
        %v297 = vld [vmem:[#allocation5 + $0x90] sm:$0xff]
        %v298 = vld [vmem:[#allocation5 + $0x98] sm:$0xff]
        %v299 = vld [vmem:[#allocation5 + $0xa0] sm:$0xff]
        %v300 = vld [vmem:[#allocation5 + $0xa8] sm:$0xff]
        %v301 = vld [vmem:[#allocation5 + $0xb0] sm:$0xff]
        %v302 = vld [vmem:[#allocation5 + $0xb8] sm:$0xff]
        %v303 = vld [vmem:[#allocation5 + $0xc0] sm:$0xff]
        %v304 = vld [vmem:[#allocation5 + $0xc8] sm:$0xff]
        %v305 = vld [vmem:[#allocation5 + $0xd0] sm:$0xff]
        %v306 = vld [vmem:[#allocation5 + $0xd8] sm:$0xff]
        %v307 = vld [vmem:[#allocation5 + $0xe0] sm:$0xff]
        %v308 = vld [vmem:[#allocation5 + $0xe8] sm:$0xff]
        %v309 = vld [vmem:[#allocation5 + $0xf0] sm:$0xff]
        %v310 = vld [vmem:[#allocation5 + $0xf8] sm:$0xff]
        %v311 = vld [vmem:[%s2] sm:$0x1]
        %v313 = vlaneseq
        %v314 = vshrl.u32 %v313, 7
        %v315 = vsub.s32 0, %v314
        %v316 = vrot.slane %v311, %v315
        %318 = vmatprep.subr.mxu0 0.0
        %319 = vmatpush1.msra.mxu0 %v294
        %320 = vmatprep.subr.mxu0 0.0
        %321 = vmatpush1.msra.mxu0 %v293
        %322 = vmatprep.subr.mxu0 0.0
        %323 = vmatpush1.msra.mxu0 %v292
        %324 = vmatprep.subr.mxu0 0.0
        %325 = vmatpush1.msra.mxu0 %v291
        %326 = vmatprep.subr.mxu0 0.0
        %327 = vmatpush1.msra.mxu0 %v290
        %328 = vmatprep.subr.mxu0 0.0
        %329 = vmatpush1.msra.mxu0 %v289
        %330 = vmatprep.subr.mxu0 0.0
        %331 = vmatpush1.msra.mxu0 %v288
        %332 = vmatprep.subr.mxu0 0.0
        %333 = vmatpush1.msra.mxu0 %v287
        %334 = vmatprep.subr.mxu0 0.0
        %335 = vmatpush1.msra.mxu0 %v286
        %336 = vmatprep.subr.mxu0 0.0
        %337 = vmatpush1.msra.mxu0 %v285
        %338 = vmatprep.subr.mxu0 0.0
        %339 = vmatpush1.msra.mxu0 %v284
        %340 = vmatprep.subr.mxu0 0.0
        %341 = vmatpush1.msra.mxu0 %v283
        %342 = vmatprep.subr.mxu0 0.0
        %343 = vmatpush1.msra.mxu0 %v282
        %344 = vmatprep.subr.mxu0 0.0
        %345 = vmatpush1.msra.mxu0 %v281
        %346 = vmatprep.subr.mxu0 0.0
        %347 = vmatpush1.msra.mxu0 %v280
        %348 = vmatprep.subr.mxu0 0.0
        %349 = vmatpush1.msra.mxu0 %v279
        %350 = vmatprep.subr.mxu0 0.0
        %351 = vmatpush2.msra.mxu0 %v310
        %352 = vmatprep.subr.mxu0 0.0
        %353 = vmatpush2.msra.mxu0 %v309
        %354 = vmatprep.subr.mxu0 0.0
        %355 = vmatpush2.msra.mxu0 %v308
        %356 = vmatprep.subr.mxu0 0.0
        %357 = vmatpush2.msra.mxu0 %v307
        %358 = vmatprep.subr.mxu0 0.0
        %359 = vmatpush2.msra.mxu0 %v306
        %360 = vmatprep.subr.mxu0 0.0
        %361 = vmatpush2.msra.mxu0 %v305
        %362 = vmatprep.subr.mxu0 0.0
        %363 = vmatpush2.msra.mxu0 %v304
        %364 = vmatprep.subr.mxu0 0.0
        %365 = vmatpush2.msra.mxu0 %v303
        %366 = vmatprep.subr.mxu0 0.0
        %367 = vmatpush2.msra.mxu0 %v302
        %368 = vmatprep.subr.mxu0 0.0
        %369 = vmatpush2.msra.mxu0 %v301
        %370 = vmatprep.subr.mxu0 0.0
        %371 = vmatpush2.msra.mxu0 %v300
        %372 = vmatprep.subr.mxu0 0.0
        %373 = vmatpush2.msra.mxu0 %v299
        %374 = vmatprep.subr.mxu0 0.0
        %375 = vmatpush2.msra.mxu0 %v298
        %376 = vmatprep.subr.mxu0 0.0
        %377 = vmatpush2.msra.mxu0 %v297
        %378 = vmatprep.subr.mxu0 0.0
        %379 = vmatpush2.msra.mxu0 %v296
        %380 = vmatprep.subr.mxu0 0.0
        %381 = vmatpush2.msra.mxu0 %v295
        %382 = vmatprep.mubr.f32.mxu0 %v276
        %383 = vmatmul.mubr.f32.gmra.mxu0 %v275
        %v384 = vpop.f32.mrf.mxu0
        %v385 = vadd.f32 %v316, %v384
        %v386 = vpop.f32.mrf.mxu0
        %387 = vmatprep.mubr.f32.mxu0 %v278
        %388 = vmatmul.mubr.f32.gmra.mxu0 %v277
        %v389 = vpop.f32.mrf.mxu0
        %v390 = vadd.f32 %v316, %v389
        %v391 = vpop.f32.mrf.mxu0
        %392 = vdwg.mxu0
        %vm393 = vcmask 523520
        %v394 = vsel %vm393, %v385, -inf
        %395 = vmax.xlane.f32.xlu0 %v394
        %v396 = vpop.xlane.xlu0 %395
        %v397 = vsel %vm393, %v390, -inf
        %398 = vmax.xlane.f32.xlu0 %v397
        %v399 = vpop.xlane.xlu0 %398
        %v400 = vsel %vm393, %v385, inf
        %401 = vmin.xlane.f32.xlu0 %v400
        %v402 = vpop.xlane.xlu0 %401
        %v403 = vsel %vm393, %v390, inf
        %404 = vmin.xlane.f32.xlu0 %v403
        %v405 = vpop.xlane.xlu0 %404
        %vm406 = vcmp.ge.f32.partialorder %v385, 0.0
        %vm407 = vcmp.ge.f32.partialorder %v390, 0.0
        %v408 = vmul.f32 %v385, %v396
        %v409 = vmul.f32 %v390, %v399
        %v410 = vmul.f32 %v385, %v402
        %v411 = vmul.f32 %v390, %v405
        %v412 = vsel %vm406, %v408, %v410
        %v413 = vsel %vm407, %v409, %v411
        %v414 = vlaneseq
        %v415 = vshrl.u32 %v414, 7
        %v416 = vsub.s32 0, %v415
        %v417 = vrot.slane %v385, %v416
        %s419 = sor.u32 256, 64
        %420 = vbcast.lane.b32.xlu0 %v417, %s419
        %v421 = vpop.permute.xlu0 %420
        %s423 = sor.u32 256, 72
        %424 = vbcast.lane.b32.xlu0 %v417, %s423
        %v425 = vpop.permute.xlu0 %424
        %s427 = sor.u32 256, 80
        %428 = vbcast.lane.b32.xlu0 %v417, %s427
        %v429 = vpop.permute.xlu0 %428
        %s431 = sor.u32 256, 88
        %432 = vbcast.lane.b32.xlu0 %v417, %s431
        %v433 = vpop.permute.xlu0 %432
        %v434 = vlaneseq
        %v435 = vshrl.u32 %v434, 7
        %v436 = vsub.s32 1, %v435
        %v437 = vrot.slane %v385, %v436
        %s439 = sor.u32 256, 64
        %440 = vbcast.lane.b32.xlu0 %v437, %s439
        %v441 = vpop.permute.xlu0 %440
        %s443 = sor.u32 256, 72
        %444 = vbcast.lane.b32.xlu0 %v437, %s443
        %v445 = vpop.permute.xlu0 %444
        %s447 = sor.u32 256, 80
        %448 = vbcast.lane.b32.xlu0 %v437, %s447
        %v449 = vpop.permute.xlu0 %448
        %s451 = sor.u32 256, 88
        %452 = vbcast.lane.b32.xlu0 %v437, %s451
        %v453 = vpop.permute.xlu0 %452
        %v454 = vlaneseq
        %v455 = vshrl.u32 %v454, 7
        %v456 = vsub.s32 2, %v455
        %v457 = vrot.slane %v385, %v456
        %s459 = sor.u32 256, 64
        %460 = vbcast.lane.b32.xlu0 %v457, %s459
        %v461 = vpop.permute.xlu0 %460
        %s463 = sor.u32 256, 72
        %464 = vbcast.lane.b32.xlu0 %v457, %s463
        %v465 = vpop.permute.xlu0 %464
        %s467 = sor.u32 256, 80
        %468 = vbcast.lane.b32.xlu0 %v457, %s467
        %v469 = vpop.permute.xlu0 %468
        %s471 = sor.u32 256, 88
        %472 = vbcast.lane.b32.xlu0 %v457, %s471
        %v473 = vpop.permute.xlu0 %472
        %v474 = vlaneseq
        %v475 = vshrl.u32 %v474, 7
        %v476 = vsub.s32 3, %v475
        %v477 = vrot.slane %v385, %v476
        %s479 = sor.u32 256, 64
        %480 = vbcast.lane.b32.xlu0 %v477, %s479
        %v481 = vpop.permute.xlu0 %480
        %s483 = sor.u32 256, 72
        %484 = vbcast.lane.b32.xlu0 %v477, %s483
        %v485 = vpop.permute.xlu0 %484
        %s487 = sor.u32 256, 80
        %488 = vbcast.lane.b32.xlu0 %v477, %s487
        %v489 = vpop.permute.xlu0 %488
        %s491 = sor.u32 256, 88
        %492 = vbcast.lane.b32.xlu0 %v477, %s491
        %v493 = vpop.permute.xlu0 %492
        %v494 = vlaneseq
        %v495 = vshrl.u32 %v494, 7
        %v496 = vsub.s32 4, %v495
        %v497 = vrot.slane %v385, %v496
        %s499 = sor.u32 256, 64
        %500 = vbcast.lane.b32.xlu0 %v497, %s499
        %v501 = vpop.permute.xlu0 %500
        %s503 = sor.u32 256, 72
        %504 = vbcast.lane.b32.xlu0 %v497, %s503
        %v505 = vpop.permute.xlu0 %504
        %s507 = sor.u32 256, 80
        %508 = vbcast.lane.b32.xlu0 %v497, %s507
        %v509 = vpop.permute.xlu0 %508
        %s511 = sor.u32 256, 88
        %512 = vbcast.lane.b32.xlu0 %v497, %s511
        %v513 = vpop.permute.xlu0 %512
        %v514 = vlaneseq
        %v515 = vshrl.u32 %v514, 7
        %v516 = vsub.s32 5, %v515
        %v517 = vrot.slane %v385, %v516
        %s519 = sor.u32 256, 64
        %520 = vbcast.lane.b32.xlu0 %v517, %s519
        %v521 = vpop.permute.xlu0 %520
        %s523 = sor.u32 256, 72
        %524 = vbcast.lane.b32.xlu0 %v517, %s523
        %v525 = vpop.permute.xlu0 %524
        %s527 = sor.u32 256, 80
        %528 = vbcast.lane.b32.xlu0 %v517, %s527
        %v529 = vpop.permute.xlu0 %528
        %s531 = sor.u32 256, 88
        %532 = vbcast.lane.b32.xlu0 %v517, %s531
        %v533 = vpop.permute.xlu0 %532
        %v534 = vlaneseq
        %v535 = vshrl.u32 %v534, 7
        %v536 = vsub.s32 6, %v535
        %v537 = vrot.slane %v385, %v536
        %s539 = sor.u32 256, 64
        %540 = vbcast.lane.b32.xlu0 %v537, %s539
        %v541 = vpop.permute.xlu0 %540
        %s543 = sor.u32 256, 72
        %544 = vbcast.lane.b32.xlu0 %v537, %s543
        %v545 = vpop.permute.xlu0 %544
        %s547 = sor.u32 256, 80
        %548 = vbcast.lane.b32.xlu0 %v537, %s547
        %v549 = vpop.permute.xlu0 %548
        %s551 = sor.u32 256, 88
        %552 = vbcast.lane.b32.xlu0 %v537, %s551
        %v553 = vpop.permute.xlu0 %552
        %v554 = vlaneseq
        %v555 = vshrl.u32 %v554, 7
        %v556 = vsub.s32 7, %v555
        %v557 = vrot.slane %v385, %v556
        %s559 = sor.u32 256, 64
        %560 = vbcast.lane.b32.xlu0 %v557, %s559
        %v561 = vpop.permute.xlu0 %560
        %s563 = sor.u32 256, 72
        %564 = vbcast.lane.b32.xlu0 %v557, %s563
        %v565 = vpop.permute.xlu0 %564
        %s567 = sor.u32 256, 80
        %568 = vbcast.lane.b32.xlu0 %v557, %s567
        %v569 = vpop.permute.xlu0 %568
        %s571 = sor.u32 256, 88
        %572 = vbcast.lane.b32.xlu0 %v557, %s571
        %v573 = vpop.permute.xlu0 %572
        %v574 = vlaneseq
        %v575 = vshrl.u32 %v574, 7
        %v576 = vsub.s32 0, %v575
        %v577 = vrot.slane %v390, %v576
        %s579 = sor.u32 256, 64
        %580 = vbcast.lane.b32.xlu0 %v577, %s579
        %v581 = vpop.permute.xlu0 %580
        %s583 = sor.u32 256, 72
        %584 = vbcast.lane.b32.xlu0 %v577, %s583
        %v585 = vpop.permute.xlu0 %584
        %s587 = sor.u32 256, 80
        %588 = vbcast.lane.b32.xlu0 %v577, %s587
        %v589 = vpop.permute.xlu0 %588
        %s591 = sor.u32 256, 88
        %592 = vbcast.lane.b32.xlu0 %v577, %s591
        %v593 = vpop.permute.xlu0 %592
        %v594 = vlaneseq
        %v595 = vshrl.u32 %v594, 7
        %v596 = vsub.s32 1, %v595
        %v597 = vrot.slane %v390, %v596
        %s599 = sor.u32 256, 64
        %600 = vbcast.lane.b32.xlu0 %v597, %s599
        %v601 = vpop.permute.xlu0 %600
        %s603 = sor.u32 256, 72
        %604 = vbcast.lane.b32.xlu0 %v597, %s603
        %v605 = vpop.permute.xlu0 %604
        %s607 = sor.u32 256, 80
        %608 = vbcast.lane.b32.xlu0 %v597, %s607
        %v609 = vpop.permute.xlu0 %608
        %s611 = sor.u32 256, 88
        %612 = vbcast.lane.b32.xlu0 %v597, %s611
        %v613 = vpop.permute.xlu0 %612
        %v614 = vlaneseq
        %v615 = vshrl.u32 %v614, 7
        %v616 = vsub.s32 2, %v615
        %v617 = vrot.slane %v390, %v616
        %s619 = sor.u32 256, 64
        %620 = vbcast.lane.b32.xlu0 %v617, %s619
        %v621 = vpop.permute.xlu0 %620
        %s623 = sor.u32 256, 72
        %624 = vbcast.lane.b32.xlu0 %v617, %s623
        %v625 = vpop.permute.xlu0 %624
        %s627 = sor.u32 256, 80
        %628 = vbcast.lane.b32.xlu0 %v617, %s627
        %v629 = vpop.permute.xlu0 %628
        %s631 = sor.u32 256, 88
        %632 = vbcast.lane.b32.xlu0 %v617, %s631
        %v633 = vpop.permute.xlu0 %632
        %v634 = vlaneseq
        %v635 = vshrl.u32 %v634, 7
        %v636 = vsub.s32 3, %v635
        %v637 = vrot.slane %v390, %v636
        %s639 = sor.u32 256, 64
        %640 = vbcast.lane.b32.xlu0 %v637, %s639
        %v641 = vpop.permute.xlu0 %640
        %s643 = sor.u32 256, 72
        %644 = vbcast.lane.b32.xlu0 %v637, %s643
        %v645 = vpop.permute.xlu0 %644
        %s647 = sor.u32 256, 80
        %648 = vbcast.lane.b32.xlu0 %v637, %s647
        %v649 = vpop.permute.xlu0 %648
        %s651 = sor.u32 256, 88
        %652 = vbcast.lane.b32.xlu0 %v637, %s651
        %v653 = vpop.permute.xlu0 %652
        %v654 = vlaneseq
        %v655 = vshrl.u32 %v654, 7
        %v656 = vsub.s32 4, %v655
        %v657 = vrot.slane %v390, %v656
        %s659 = sor.u32 256, 64
        %660 = vbcast.lane.b32.xlu0 %v657, %s659
        %v661 = vpop.permute.xlu0 %660
        %s663 = sor.u32 256, 72
        %664 = vbcast.lane.b32.xlu0 %v657, %s663
        %v665 = vpop.permute.xlu0 %664
        %s667 = sor.u32 256, 80
        %668 = vbcast.lane.b32.xlu0 %v657, %s667
        %v669 = vpop.permute.xlu0 %668
        %s671 = sor.u32 256, 88
        %672 = vbcast.lane.b32.xlu0 %v657, %s671
        %v673 = vpop.permute.xlu0 %672
        %v674 = vlaneseq
        %v675 = vshrl.u32 %v674, 7
        %v676 = vsub.s32 5, %v675
        %v677 = vrot.slane %v390, %v676
        %s679 = sor.u32 256, 64
        %680 = vbcast.lane.b32.xlu0 %v677, %s679
        %v681 = vpop.permute.xlu0 %680
        %s683 = sor.u32 256, 72
        %684 = vbcast.lane.b32.xlu0 %v677, %s683
        %v685 = vpop.permute.xlu0 %684
        %s687 = sor.u32 256, 80
        %688 = vbcast.lane.b32.xlu0 %v677, %s687
        %v689 = vpop.permute.xlu0 %688
        %s691 = sor.u32 256, 88
        %692 = vbcast.lane.b32.xlu0 %v677, %s691
        %v693 = vpop.permute.xlu0 %692
        %v694 = vlaneseq
        %v695 = vshrl.u32 %v694, 7
        %v696 = vsub.s32 6, %v695
        %v697 = vrot.slane %v390, %v696
        %s699 = sor.u32 256, 64
        %700 = vbcast.lane.b32.xlu0 %v697, %s699
        %v701 = vpop.permute.xlu0 %700
        %s703 = sor.u32 256, 72
        %704 = vbcast.lane.b32.xlu0 %v697, %s703
        %v705 = vpop.permute.xlu0 %704
        %s707 = sor.u32 256, 80
        %708 = vbcast.lane.b32.xlu0 %v697, %s707
        %v709 = vpop.permute.xlu0 %708
        %s711 = sor.u32 256, 88
        %712 = vbcast.lane.b32.xlu0 %v697, %s711
        %v713 = vpop.permute.xlu0 %712
        %v714 = vlaneseq
        %v715 = vshrl.u32 %v714, 7
        %v716 = vsub.s32 7, %v715
        %v717 = vrot.slane %v390, %v716
        %s719 = sor.u32 256, 64
        %720 = vbcast.lane.b32.xlu0 %v717, %s719
        %v721 = vpop.permute.xlu0 %720
        %s723 = sor.u32 256, 72
        %724 = vbcast.lane.b32.xlu0 %v717, %s723
        %v725 = vpop.permute.xlu0 %724
        %s727 = sor.u32 256, 80
        %728 = vbcast.lane.b32.xlu0 %v717, %s727
        %v729 = vpop.permute.xlu0 %728
        %s731 = sor.u32 256, 88
        %732 = vbcast.lane.b32.xlu0 %v717, %s731
        %v733 = vpop.permute.xlu0 %732
        %v736 = vcombine.high %v385, %v385
        %v738 = vunpack.c.l.s4 1966171168
        %v739 = vunpack.c.0.s8 %v738
        %v740 = vlaneseq
        %v741 = vshrl.u32 %v740, 7
        %v742 = vsub.s32 %v739, %v741
        %v743 = vrot.slane %v385, %v742
        %v745 = vunpack.c.l.s4 1966171168
        %v746 = vunpack.c.0.s8 %v745
        %v747 = vlaneseq
        %v748 = vshrl.u32 %v747, 7
        %v749 = vsub.s32 %v746, %v748
        %v750 = vrot.slane %v736, %v749
        %v751 = vcombine.high %v743, %v743
        %v752 = vcombine.high %v750, %v750
        %v754 = vunpack.c.l.s4 1966171168
        %v755 = vunpack.c.0.s8 %v754
        %v756 = vlaneseq
        %v757 = vshrl.u32 %v756, 7
        %v758 = vsub.s32 %v755, %v757
        %v759 = vrot.slane %v743, %v758
        %v761 = vunpack.c.l.s4 1966171168
        %v762 = vunpack.c.0.s8 %v761
        %v763 = vlaneseq
        %v764 = vshrl.u32 %v763, 7
        %v765 = vsub.s32 %v762, %v764
        %v766 = vrot.slane %v750, %v765
        %v768 = vunpack.c.l.s4 1966171168
        %v769 = vunpack.c.0.s8 %v768
        %v770 = vlaneseq
        %v771 = vshrl.u32 %v770, 7
        %v772 = vsub.s32 %v769, %v771
        %v773 = vrot.slane %v751, %v772
        %v775 = vunpack.c.l.s4 1966171168
        %v776 = vunpack.c.0.s8 %v775
        %v777 = vlaneseq
        %v778 = vshrl.u32 %v777, 7
        %v779 = vsub.s32 %v776, %v778
        %v780 = vrot.slane %v752, %v779
        %v781 = vcombine.high %v759, %v759
        %v782 = vcombine.high %v766, %v766
        %v783 = vcombine.high %v773, %v773
        %v784 = vcombine.high %v780, %v780
        %v785 = vcombine.high %v390, %v390
        %v787 = vunpack.c.l.s4 1966171168
        %v788 = vunpack.c.0.s8 %v787
        %v789 = vlaneseq
        %v790 = vshrl.u32 %v789, 7
        %v791 = vsub.s32 %v788, %v790
        %v792 = vrot.slane %v390, %v791
        %v794 = vunpack.c.l.s4 1966171168
        %v795 = vunpack.c.0.s8 %v794
        %v796 = vlaneseq
        %v797 = vshrl.u32 %v796, 7
        %v798 = vsub.s32 %v795, %v797
        %v799 = vrot.slane %v785, %v798
        %v800 = vcombine.high %v792, %v792
        %v801 = vcombine.high %v799, %v799
        %v803 = vunpack.c.l.s4 1966171168
        %v804 = vunpack.c.0.s8 %v803
        %v805 = vlaneseq
        %v806 = vshrl.u32 %v805, 7
        %v807 = vsub.s32 %v804, %v806
        %v808 = vrot.slane %v792, %v807
        %v810 = vunpack.c.l.s4 1966171168
        %v811 = vunpack.c.0.s8 %v810
        %v812 = vlaneseq
        %v813 = vshrl.u32 %v812, 7
        %v814 = vsub.s32 %v811, %v813
        %v815 = vrot.slane %v799, %v814
        %v817 = vunpack.c.l.s4 1966171168
        %v818 = vunpack.c.0.s8 %v817
        %v819 = vlaneseq
        %v820 = vshrl.u32 %v819, 7
        %v821 = vsub.s32 %v818, %v820
        %v822 = vrot.slane %v800, %v821
        %v824 = vunpack.c.l.s4 1966171168
        %v825 = vunpack.c.0.s8 %v824
        %v826 = vlaneseq
        %v827 = vshrl.u32 %v826, 7
        %v828 = vsub.s32 %v825, %v827
        %v829 = vrot.slane %v801, %v828
        %v830 = vcombine.high %v808, %v808
        %v831 = vcombine.high %v815, %v815
        %v832 = vcombine.high %v822, %v822
        %v833 = vcombine.high %v829, %v829
        %v834 = vlaneseq
        %v835 = vshrl.u32 %v834, 7
        %v836 = vsub.s32 0, %v835
        %v837 = vrot.slane %v759, %v836
        %v838 = vlaneseq
        %v839 = vshrl.u32 %v838, 7
        %v840 = vsub.s32 0, %v839
        %v841 = vrot.slane %v773, %v840
        %v842 = vlaneseq
        %v843 = vshrl.u32 %v842, 7
        %v844 = vsub.s32 0, %v843
        %v845 = vrot.slane %v781, %v844
        %v846 = vlaneseq
        %v847 = vshrl.u32 %v846, 7
        %v848 = vsub.s32 0, %v847
        %v849 = vrot.slane %v783, %v848
        %v850 = vlaneseq
        %v851 = vshrl.u32 %v850, 7
        %v852 = vsub.s32 0, %v851
        %v853 = vrot.slane %v766, %v852
        %v854 = vlaneseq
        %v855 = vshrl.u32 %v854, 7
        %v856 = vsub.s32 0, %v855
        %v857 = vrot.slane %v780, %v856
        %v858 = vlaneseq
        %v859 = vshrl.u32 %v858, 7
        %v860 = vsub.s32 0, %v859
        %v861 = vrot.slane %v782, %v860
        %v862 = vlaneseq
        %v863 = vshrl.u32 %v862, 7
        %v864 = vsub.s32 0, %v863
        %v865 = vrot.slane %v784, %v864
        %v866 = vlaneseq
        %v867 = vshrl.u32 %v866, 7
        %v868 = vsub.s32 0, %v867
        %v869 = vrot.slane %v808, %v868
        %v870 = vlaneseq
        %v871 = vshrl.u32 %v870, 7
        %v872 = vsub.s32 0, %v871
        %v873 = vrot.slane %v822, %v872
        %v874 = vlaneseq
        %v875 = vshrl.u32 %v874, 7
        %v876 = vsub.s32 0, %v875
        %v877 = vrot.slane %v830, %v876
        %v878 = vlaneseq
        %v879 = vshrl.u32 %v878, 7
        %v880 = vsub.s32 0, %v879
        %v881 = vrot.slane %v832, %v880
        %v882 = vlaneseq
        %v883 = vshrl.u32 %v882, 7
        %v884 = vsub.s32 0, %v883
        %v885 = vrot.slane %v815, %v884
        %v886 = vlaneseq
        %v887 = vshrl.u32 %v886, 7
        %v888 = vsub.s32 0, %v887
        %v889 = vrot.slane %v829, %v888
        %v890 = vlaneseq
        %v891 = vshrl.u32 %v890, 7
        %v892 = vsub.s32 0, %v891
        %v893 = vrot.slane %v831, %v892
        %v894 = vlaneseq
        %v895 = vshrl.u32 %v894, 7
        %v896 = vsub.s32 0, %v895
        %v897 = vrot.slane %v833, %v896
        %v914 = vmul.f32 %v421, %v837
        %v915 = vmul.f32 %v425, %v837
        %v916 = vmul.f32 %v429, %v837
        %v917 = vmul.f32 %v433, %v837
        %v918 = vmul.f32 %v441, %v841
        %v919 = vmul.f32 %v445, %v841
        %v920 = vmul.f32 %v449, %v841
        %v921 = vmul.f32 %v453, %v841
        %v922 = vmul.f32 %v461, %v845
        %v923 = vmul.f32 %v465, %v845
        %v924 = vmul.f32 %v469, %v845
        %v925 = vmul.f32 %v473, %v845
        %v926 = vmul.f32 %v481, %v849
        %v927 = vmul.f32 %v485, %v849
        %v928 = vmul.f32 %v489, %v849
        %v929 = vmul.f32 %v493, %v849
        %v930 = vmul.f32 %v501, %v853
        %v931 = vmul.f32 %v505, %v853
        %v932 = vmul.f32 %v509, %v853
        %v933 = vmul.f32 %v513, %v853
        %v934 = vmul.f32 %v521, %v857
        %v935 = vmul.f32 %v525, %v857
        %v936 = vmul.f32 %v529, %v857
        %v937 = vmul.f32 %v533, %v857
        %v938 = vmul.f32 %v541, %v861
        %v939 = vmul.f32 %v545, %v861
        %v940 = vmul.f32 %v549, %v861
        %v941 = vmul.f32 %v553, %v861
        %v942 = vmul.f32 %v561, %v865
        %v943 = vmul.f32 %v565, %v865
        %v944 = vmul.f32 %v569, %v865
        %v945 = vmul.f32 %v573, %v865
        %v946 = vmul.f32 %v581, %v869
        %v947 = vmul.f32 %v585, %v869
        %v948 = vmul.f32 %v589, %v869
        %v949 = vmul.f32 %v593, %v869
        %v950 = vmul.f32 %v601, %v873
        %v951 = vmul.f32 %v605, %v873
        %v952 = vmul.f32 %v609, %v873
        %v953 = vmul.f32 %v613, %v873
        %v954 = vmul.f32 %v621, %v877
        %v955 = vmul.f32 %v625, %v877
        %v956 = vmul.f32 %v629, %v877
        %v957 = vmul.f32 %v633, %v877
        %v958 = vmul.f32 %v641, %v881
        %v959 = vmul.f32 %v645, %v881
        %v960 = vmul.f32 %v649, %v881
        %v961 = vmul.f32 %v653, %v881
        %v962 = vmul.f32 %v661, %v885
        %v963 = vmul.f32 %v665, %v885
        %v964 = vmul.f32 %v669, %v885
        %v965 = vmul.f32 %v673, %v885
        %v966 = vmul.f32 %v681, %v889
        %v967 = vmul.f32 %v685, %v889
        %v968 = vmul.f32 %v689, %v889
        %v969 = vmul.f32 %v693, %v889
        %v970 = vmul.f32 %v701, %v893
        %v971 = vmul.f32 %v705, %v893
        %v972 = vmul.f32 %v709, %v893
        %v973 = vmul.f32 %v713, %v893
        %v974 = vmul.f32 %v721, %v897
        %v975 = vmul.f32 %v725, %v897
        %v976 = vmul.f32 %v729, %v897
        %v977 = vmul.f32 %v733, %v897
        %v978 = vlaneseq
        %v979 = vshrl.u32 %v978, 7
        %v980 = vsub.s32 0, %v979
        %v981 = vrot.slane %v412, %v980
        %s983 = sor.u32 256, 64
        %984 = vbcast.lane.b32.xlu0 %v981, %s983
        %v985 = vpop.permute.xlu0 %984
        %s987 = sor.u32 256, 72
        %988 = vbcast.lane.b32.xlu0 %v981, %s987
        %v989 = vpop.permute.xlu0 %988
        %s991 = sor.u32 256, 80
        %992 = vbcast.lane.b32.xlu0 %v981, %s991
        %v993 = vpop.permute.xlu0 %992
        %s995 = sor.u32 256, 88
        %996 = vbcast.lane.b32.xlu0 %v981, %s995
        %v997 = vpop.permute.xlu0 %996
        %v998 = vlaneseq
        %v999 = vshrl.u32 %v998, 7
        %v1000 = vsub.s32 1, %v999
        %v1001 = vrot.slane %v412, %v1000
        %s1003 = sor.u32 256, 64
        %1004 = vbcast.lane.b32.xlu0 %v1001, %s1003
        %v1005 = vpop.permute.xlu0 %1004
        %s1007 = sor.u32 256, 72
        %1008 = vbcast.lane.b32.xlu0 %v1001, %s1007
        %v1009 = vpop.permute.xlu0 %1008
        %s1011 = sor.u32 256, 80
        %1012 = vbcast.lane.b32.xlu0 %v1001, %s1011
        %v1013 = vpop.permute.xlu0 %1012
        %s1015 = sor.u32 256, 88
        %1016 = vbcast.lane.b32.xlu0 %v1001, %s1015
        %v1017 = vpop.permute.xlu0 %1016
        %v1018 = vlaneseq
        %v1019 = vshrl.u32 %v1018, 7
        %v1020 = vsub.s32 2, %v1019
        %v1021 = vrot.slane %v412, %v1020
        %s1023 = sor.u32 256, 64
        %1024 = vbcast.lane.b32.xlu0 %v1021, %s1023
        %v1025 = vpop.permute.xlu0 %1024
        %s1027 = sor.u32 256, 72
        %1028 = vbcast.lane.b32.xlu0 %v1021, %s1027
        %v1029 = vpop.permute.xlu0 %1028
        %s1031 = sor.u32 256, 80
        %1032 = vbcast.lane.b32.xlu0 %v1021, %s1031
        %v1033 = vpop.permute.xlu0 %1032
        %s1035 = sor.u32 256, 88
        %1036 = vbcast.lane.b32.xlu0 %v1021, %s1035
        %v1037 = vpop.permute.xlu0 %1036
        %v1038 = vlaneseq
        %v1039 = vshrl.u32 %v1038, 7
        %v1040 = vsub.s32 3, %v1039
        %v1041 = vrot.slane %v412, %v1040
        %s1043 = sor.u32 256, 64
        %1044 = vbcast.lane.b32.xlu0 %v1041, %s1043
        %v1045 = vpop.permute.xlu0 %1044
        %s1047 = sor.u32 256, 72
        %1048 = vbcast.lane.b32.xlu0 %v1041, %s1047
        %v1049 = vpop.permute.xlu0 %1048
        %s1051 = sor.u32 256, 80
        %1052 = vbcast.lane.b32.xlu0 %v1041, %s1051
        %v1053 = vpop.permute.xlu0 %1052
        %s1055 = sor.u32 256, 88
        %1056 = vbcast.lane.b32.xlu0 %v1041, %s1055
        %v1057 = vpop.permute.xlu0 %1056
        %v1058 = vlaneseq
        %v1059 = vshrl.u32 %v1058, 7
        %v1060 = vsub.s32 4, %v1059
        %v1061 = vrot.slane %v412, %v1060
        %s1063 = sor.u32 256, 64
        %1064 = vbcast.lane.b32.xlu0 %v1061, %s1063
        %v1065 = vpop.permute.xlu0 %1064
        %s1067 = sor.u32 256, 72
        %1068 = vbcast.lane.b32.xlu0 %v1061, %s1067
        %v1069 = vpop.permute.xlu0 %1068
        %s1071 = sor.u32 256, 80
        %1072 = vbcast.lane.b32.xlu0 %v1061, %s1071
        %v1073 = vpop.permute.xlu0 %1072
        %s1075 = sor.u32 256, 88
        %1076 = vbcast.lane.b32.xlu0 %v1061, %s1075
        %v1077 = vpop.permute.xlu0 %1076
        %v1078 = vlaneseq
        %v1079 = vshrl.u32 %v1078, 7
        %v1080 = vsub.s32 5, %v1079
        %v1081 = vrot.slane %v412, %v1080
        %s1083 = sor.u32 256, 64
        %1084 = vbcast.lane.b32.xlu0 %v1081, %s1083
        %v1085 = vpop.permute.xlu0 %1084
        %s1087 = sor.u32 256, 72
        %1088 = vbcast.lane.b32.xlu0 %v1081, %s1087
        %v1089 = vpop.permute.xlu0 %1088
        %s1091 = sor.u32 256, 80
        %1092 = vbcast.lane.b32.xlu0 %v1081, %s1091
        %v1093 = vpop.permute.xlu0 %1092
        %s1095 = sor.u32 256, 88
        %1096 = vbcast.lane.b32.xlu0 %v1081, %s1095
        %v1097 = vpop.permute.xlu0 %1096
        %v1098 = vlaneseq
        %v1099 = vshrl.u32 %v1098, 7
        %v1100 = vsub.s32 6, %v1099
        %v1101 = vrot.slane %v412, %v1100
        %s1103 = sor.u32 256, 64
        %1104 = vbcast.lane.b32.xlu0 %v1101, %s1103
        %v1105 = vpop.permute.xlu0 %1104
        %s1107 = sor.u32 256, 72
        %1108 = vbcast.lane.b32.xlu0 %v1101, %s1107
        %v1109 = vpop.permute.xlu0 %1108
        %s1111 = sor.u32 256, 80
        %1112 = vbcast.lane.b32.xlu0 %v1101, %s1111
        %v1113 = vpop.permute.xlu0 %1112
        %s1115 = sor.u32 256, 88
        %1116 = vbcast.lane.b32.xlu0 %v1101, %s1115
        %v1117 = vpop.permute.xlu0 %1116
        %v1118 = vlaneseq
        %v1119 = vshrl.u32 %v1118, 7
        %v1120 = vsub.s32 7, %v1119
        %v1121 = vrot.slane %v412, %v1120
        %s1123 = sor.u32 256, 64
        %1124 = vbcast.lane.b32.xlu0 %v1121, %s1123
        %v1125 = vpop.permute.xlu0 %1124
        %s1127 = sor.u32 256, 72
        %1128 = vbcast.lane.b32.xlu0 %v1121, %s1127
        %v1129 = vpop.permute.xlu0 %1128
        %s1131 = sor.u32 256, 80
        %1132 = vbcast.lane.b32.xlu0 %v1121, %s1131
        %v1133 = vpop.permute.xlu0 %1132
        %s1135 = sor.u32 256, 88
        %1136 = vbcast.lane.b32.xlu0 %v1121, %s1135
        %v1137 = vpop.permute.xlu0 %1136
        %v1138 = vlaneseq
        %v1139 = vshrl.u32 %v1138, 7
        %v1140 = vsub.s32 0, %v1139
        %v1141 = vrot.slane %v413, %v1140
        %s1143 = sor.u32 256, 64
        %1144 = vbcast.lane.b32.xlu0 %v1141, %s1143
        %v1145 = vpop.permute.xlu0 %1144
        %s1147 = sor.u32 256, 72
        %1148 = vbcast.lane.b32.xlu0 %v1141, %s1147
        %v1149 = vpop.permute.xlu0 %1148
        %s1151 = sor.u32 256, 80
        %1152 = vbcast.lane.b32.xlu0 %v1141, %s1151
        %v1153 = vpop.permute.xlu0 %1152
        %s1155 = sor.u32 256, 88
        %1156 = vbcast.lane.b32.xlu0 %v1141, %s1155
        %v1157 = vpop.permute.xlu0 %1156
        %v1158 = vlaneseq
        %v1159 = vshrl.u32 %v1158, 7
        %v1160 = vsub.s32 1, %v1159
        %v1161 = vrot.slane %v413, %v1160
        %s1163 = sor.u32 256, 64
        %1164 = vbcast.lane.b32.xlu0 %v1161, %s1163
        %v1165 = vpop.permute.xlu0 %1164
        %s1167 = sor.u32 256, 72
        %1168 = vbcast.lane.b32.xlu0 %v1161, %s1167
        %v1169 = vpop.permute.xlu0 %1168
        %s1171 = sor.u32 256, 80
        %1172 = vbcast.lane.b32.xlu0 %v1161, %s1171
        %v1173 = vpop.permute.xlu0 %1172
        %s1175 = sor.u32 256, 88
        %1176 = vbcast.lane.b32.xlu0 %v1161, %s1175
        %v1177 = vpop.permute.xlu0 %1176
        %v1178 = vlaneseq
        %v1179 = vshrl.u32 %v1178, 7
        %v1180 = vsub.s32 2, %v1179
        %v1181 = vrot.slane %v413, %v1180
        %s1183 = sor.u32 256, 64
        %1184 = vbcast.lane.b32.xlu0 %v1181, %s1183
        %v1185 = vpop.permute.xlu0 %1184
        %s1187 = sor.u32 256, 72
        %1188 = vbcast.lane.b32.xlu0 %v1181, %s1187
        %v1189 = vpop.permute.xlu0 %1188
        %s1191 = sor.u32 256, 80
        %1192 = vbcast.lane.b32.xlu0 %v1181, %s1191
        %v1193 = vpop.permute.xlu0 %1192
        %s1195 = sor.u32 256, 88
        %1196 = vbcast.lane.b32.xlu0 %v1181, %s1195
        %v1197 = vpop.permute.xlu0 %1196
        %v1198 = vlaneseq
        %v1199 = vshrl.u32 %v1198, 7
        %v1200 = vsub.s32 3, %v1199
        %v1201 = vrot.slane %v413, %v1200
        %s1203 = sor.u32 256, 64
        %1204 = vbcast.lane.b32.xlu0 %v1201, %s1203
        %v1205 = vpop.permute.xlu0 %1204
        %s1207 = sor.u32 256, 72
        %1208 = vbcast.lane.b32.xlu0 %v1201, %s1207
        %v1209 = vpop.permute.xlu0 %1208
        %s1211 = sor.u32 256, 80
        %1212 = vbcast.lane.b32.xlu0 %v1201, %s1211
        %v1213 = vpop.permute.xlu0 %1212
        %s1215 = sor.u32 256, 88
        %1216 = vbcast.lane.b32.xlu0 %v1201, %s1215
        %v1217 = vpop.permute.xlu0 %1216
        %v1218 = vlaneseq
        %v1219 = vshrl.u32 %v1218, 7
        %v1220 = vsub.s32 4, %v1219
        %v1221 = vrot.slane %v413, %v1220
        %s1223 = sor.u32 256, 64
        %1224 = vbcast.lane.b32.xlu0 %v1221, %s1223
        %v1225 = vpop.permute.xlu0 %1224
        %s1227 = sor.u32 256, 72
        %1228 = vbcast.lane.b32.xlu0 %v1221, %s1227
        %v1229 = vpop.permute.xlu0 %1228
        %s1231 = sor.u32 256, 80
        %1232 = vbcast.lane.b32.xlu0 %v1221, %s1231
        %v1233 = vpop.permute.xlu0 %1232
        %s1235 = sor.u32 256, 88
        %1236 = vbcast.lane.b32.xlu0 %v1221, %s1235
        %v1237 = vpop.permute.xlu0 %1236
        %v1238 = vlaneseq
        %v1239 = vshrl.u32 %v1238, 7
        %v1240 = vsub.s32 5, %v1239
        %v1241 = vrot.slane %v413, %v1240
        %s1243 = sor.u32 256, 64
        %1244 = vbcast.lane.b32.xlu0 %v1241, %s1243
        %v1245 = vpop.permute.xlu0 %1244
        %s1247 = sor.u32 256, 72
        %1248 = vbcast.lane.b32.xlu0 %v1241, %s1247
        %v1249 = vpop.permute.xlu0 %1248
        %s1251 = sor.u32 256, 80
        %1252 = vbcast.lane.b32.xlu0 %v1241, %s1251
        %v1253 = vpop.permute.xlu0 %1252
        %s1255 = sor.u32 256, 88
        %1256 = vbcast.lane.b32.xlu0 %v1241, %s1255
        %v1257 = vpop.permute.xlu0 %1256
        %v1258 = vlaneseq
        %v1259 = vshrl.u32 %v1258, 7
        %v1260 = vsub.s32 6, %v1259
        %v1261 = vrot.slane %v413, %v1260
        %s1263 = sor.u32 256, 64
        %1264 = vbcast.lane.b32.xlu0 %v1261, %s1263
        %v1265 = vpop.permute.xlu0 %1264
        %s1267 = sor.u32 256, 72
        %1268 = vbcast.lane.b32.xlu0 %v1261, %s1267
        %v1269 = vpop.permute.xlu0 %1268
        %s1271 = sor.u32 256, 80
        %1272 = vbcast.lane.b32.xlu0 %v1261, %s1271
        %v1273 = vpop.permute.xlu0 %1272
        %s1275 = sor.u32 256, 88
        %1276 = vbcast.lane.b32.xlu0 %v1261, %s1275
        %v1277 = vpop.permute.xlu0 %1276
        %v1278 = vlaneseq
        %v1279 = vshrl.u32 %v1278, 7
        %v1280 = vsub.s32 7, %v1279
        %v1281 = vrot.slane %v413, %v1280
        %s1283 = sor.u32 256, 64
        %1284 = vbcast.lane.b32.xlu0 %v1281, %s1283
        %v1285 = vpop.permute.xlu0 %1284
        %s1287 = sor.u32 256, 72
        %1288 = vbcast.lane.b32.xlu0 %v1281, %s1287
        %v1289 = vpop.permute.xlu0 %1288
        %s1291 = sor.u32 256, 80
        %1292 = vbcast.lane.b32.xlu0 %v1281, %s1291
        %v1293 = vpop.permute.xlu0 %1292
        %s1295 = sor.u32 256, 88
        %1296 = vbcast.lane.b32.xlu0 %v1281, %s1295
        %v1297 = vpop.permute.xlu0 %1296
        %v1298 = vsub.f32 %v914, %v985
        %v1299 = vsub.f32 %v915, %v989
        %v1300 = vsub.f32 %v916, %v993
        %v1301 = vsub.f32 %v917, %v997
        %v1302 = vsub.f32 %v918, %v1005
        %v1303 = vsub.f32 %v919, %v1009
        %v1304 = vsub.f32 %v920, %v1013
        %v1305 = vsub.f32 %v921, %v1017
        %v1306 = vsub.f32 %v922, %v1025
        %v1307 = vsub.f32 %v923, %v1029
        %v1308 = vsub.f32 %v924, %v1033
        %v1309 = vsub.f32 %v925, %v1037
        %v1310 = vsub.f32 %v926, %v1045
        %v1311 = vsub.f32 %v927, %v1049
        %v1312 = vsub.f32 %v928, %v1053
        %v1313 = vsub.f32 %v929, %v1057
        %v1314 = vsub.f32 %v930, %v1065
        %v1315 = vsub.f32 %v931, %v1069
        %v1316 = vsub.f32 %v932, %v1073
        %v1317 = vsub.f32 %v933, %v1077
        %v1318 = vsub.f32 %v934, %v1085
        %v1319 = vsub.f32 %v935, %v1089
        %v1320 = vsub.f32 %v936, %v1093
        %v1321 = vsub.f32 %v937, %v1097
        %v1322 = vsub.f32 %v938, %v1105
        %v1323 = vsub.f32 %v939, %v1109
        %v1324 = vsub.f32 %v940, %v1113
        %v1325 = vsub.f32 %v941, %v1117
        %v1326 = vsub.f32 %v942, %v1125
        %v1327 = vsub.f32 %v943, %v1129
        %v1328 = vsub.f32 %v944, %v1133
        %v1329 = vsub.f32 %v945, %v1137
        %v1330 = vsub.f32 %v946, %v1145
        %v1331 = vsub.f32 %v947, %v1149
        %v1332 = vsub.f32 %v948, %v1153
        %v1333 = vsub.f32 %v949, %v1157
        %v1334 = vsub.f32 %v950, %v1165
        %v1335 = vsub.f32 %v951, %v1169
        %v1336 = vsub.f32 %v952, %v1173
        %v1337 = vsub.f32 %v953, %v1177
        %v1338 = vsub.f32 %v954, %v1185
        %v1339 = vsub.f32 %v955, %v1189
        %v1340 = vsub.f32 %v956, %v1193
        %v1341 = vsub.f32 %v957, %v1197
        %v1342 = vsub.f32 %v958, %v1205
        %v1343 = vsub.f32 %v959, %v1209
        %v1344 = vsub.f32 %v960, %v1213
        %v1345 = vsub.f32 %v961, %v1217
        %v1346 = vsub.f32 %v962, %v1225
        %v1347 = vsub.f32 %v963, %v1229
        %v1348 = vsub.f32 %v964, %v1233
        %v1349 = vsub.f32 %v965, %v1237
        %v1350 = vsub.f32 %v966, %v1245
        %v1351 = vsub.f32 %v967, %v1249
        %v1352 = vsub.f32 %v968, %v1253
        %v1353 = vsub.f32 %v969, %v1257
        %v1354 = vsub.f32 %v970, %v1265
        %v1355 = vsub.f32 %v971, %v1269
        %v1356 = vsub.f32 %v972, %v1273
        %v1357 = vsub.f32 %v973, %v1277
        %v1358 = vsub.f32 %v974, %v1285
        %v1359 = vsub.f32 %v975, %v1289
        %v1360 = vsub.f32 %v976, %v1293
        %v1361 = vsub.f32 %v977, %v1297
        %v1362 = vmul.f32 %v1298, 1.442695
        %v1363 = vpow.pop %v1362
        %v1364 = vmul.f32 %v1299, 1.442695
        %v1365 = vpow.pop %v1364
        %v1366 = vmul.f32 %v1300, 1.442695
        %v1367 = vpow.pop %v1366
        %v1368 = vmul.f32 %v1301, 1.442695
        %v1369 = vpow.pop %v1368
        %v1370 = vmul.f32 %v1302, 1.442695
        %v1371 = vpow.pop %v1370
        %v1372 = vmul.f32 %v1303, 1.442695
        %v1373 = vpow.pop %v1372
        %v1374 = vmul.f32 %v1304, 1.442695
        %v1375 = vpow.pop %v1374
        %v1376 = vmul.f32 %v1305, 1.442695
        %v1377 = vpow.pop %v1376
        %v1378 = vmul.f32 %v1306, 1.442695
        %v1379 = vpow.pop %v1378
        %v1380 = vmul.f32 %v1307, 1.442695
        %v1381 = vpow.pop %v1380
        %v1382 = vmul.f32 %v1308, 1.442695
        %v1383 = vpow.pop %v1382
        %v1384 = vmul.f32 %v1309, 1.442695
        %v1385 = vpow.pop %v1384
        %v1386 = vmul.f32 %v1310, 1.442695
        %v1387 = vpow.pop %v1386
        %v1388 = vmul.f32 %v1311, 1.442695
        %v1389 = vpow.pop %v1388
        %v1390 = vmul.f32 %v1312, 1.442695
        %v1391 = vpow.pop %v1390
        %v1392 = vmul.f32 %v1313, 1.442695
        %v1393 = vpow.pop %v1392
        %v1394 = vmul.f32 %v1314, 1.442695
        %v1395 = vpow.pop %v1394
        %v1396 = vmul.f32 %v1315, 1.442695
        %v1397 = vpow.pop %v1396
        %v1398 = vmul.f32 %v1316, 1.442695
        %v1399 = vpow.pop %v1398
        %v1400 = vmul.f32 %v1317, 1.442695
        %v1401 = vpow.pop %v1400
        %v1402 = vmul.f32 %v1318, 1.442695
        %v1403 = vpow.pop %v1402
        %v1404 = vmul.f32 %v1319, 1.442695
        %v1405 = vpow.pop %v1404
        %v1406 = vmul.f32 %v1320, 1.442695
        %v1407 = vpow.pop %v1406
        %v1408 = vmul.f32 %v1321, 1.442695
        %v1409 = vpow.pop %v1408
        %v1410 = vmul.f32 %v1322, 1.442695
        %v1411 = vpow.pop %v1410
        %v1412 = vmul.f32 %v1323, 1.442695
        %v1413 = vpow.pop %v1412
        %v1414 = vmul.f32 %v1324, 1.442695
        %v1415 = vpow.pop %v1414
        %v1416 = vmul.f32 %v1325, 1.442695
        %v1417 = vpow.pop %v1416
        %v1418 = vmul.f32 %v1326, 1.442695
        %v1419 = vpow.pop %v1418
        %v1420 = vmul.f32 %v1327, 1.442695
        %v1421 = vpow.pop %v1420
        %v1422 = vmul.f32 %v1328, 1.442695
        %v1423 = vpow.pop %v1422
        %v1424 = vmul.f32 %v1329, 1.442695
        %v1425 = vpow.pop %v1424
        %v1426 = vmul.f32 %v1330, 1.442695
        %v1427 = vpow.pop %v1426
        %v1428 = vmul.f32 %v1331, 1.442695
        %v1429 = vpow.pop %v1428
        %v1430 = vmul.f32 %v1332, 1.442695
        %v1431 = vpow.pop %v1430
        %v1432 = vmul.f32 %v1333, 1.442695
        %v1433 = vpow.pop %v1432
        %v1434 = vmul.f32 %v1334, 1.442695
        %v1435 = vpow.pop %v1434
        %v1436 = vmul.f32 %v1335, 1.442695
        %v1437 = vpow.pop %v1436
        %v1438 = vmul.f32 %v1336, 1.442695
        %v1439 = vpow.pop %v1438
        %v1440 = vmul.f32 %v1337, 1.442695
        %v1441 = vpow.pop %v1440
        %v1442 = vmul.f32 %v1338, 1.442695
        %v1443 = vpow.pop %v1442
        %v1444 = vmul.f32 %v1339, 1.442695
        %v1445 = vpow.pop %v1444
        %v1446 = vmul.f32 %v1340, 1.442695
        %v1447 = vpow.pop %v1446
        %v1448 = vmul.f32 %v1341, 1.442695
        %v1449 = vpow.pop %v1448
        %v1450 = vmul.f32 %v1342, 1.442695
        %v1451 = vpow.pop %v1450
        %v1452 = vmul.f32 %v1343, 1.442695
        %v1453 = vpow.pop %v1452
        %v1454 = vmul.f32 %v1344, 1.442695
        %v1455 = vpow.pop %v1454
        %v1456 = vmul.f32 %v1345, 1.442695
        %v1457 = vpow.pop %v1456
        %v1458 = vmul.f32 %v1346, 1.442695
        %v1459 = vpow.pop %v1458
        %v1460 = vmul.f32 %v1347, 1.442695
        %v1461 = vpow.pop %v1460
        %v1462 = vmul.f32 %v1348, 1.442695
        %v1463 = vpow.pop %v1462
        %v1464 = vmul.f32 %v1349, 1.442695
        %v1465 = vpow.pop %v1464
        %v1466 = vmul.f32 %v1350, 1.442695
        %v1467 = vpow.pop %v1466
        %v1468 = vmul.f32 %v1351, 1.442695
        %v1469 = vpow.pop %v1468
        %v1470 = vmul.f32 %v1352, 1.442695
        %v1471 = vpow.pop %v1470
        %v1472 = vmul.f32 %v1353, 1.442695
        %v1473 = vpow.pop %v1472
        %v1474 = vmul.f32 %v1354, 1.442695
        %v1475 = vpow.pop %v1474
        %v1476 = vmul.f32 %v1355, 1.442695
        %v1477 = vpow.pop %v1476
        %v1478 = vmul.f32 %v1356, 1.442695
        %v1479 = vpow.pop %v1478
        %v1480 = vmul.f32 %v1357, 1.442695
        %v1481 = vpow.pop %v1480
        %v1482 = vmul.f32 %v1358, 1.442695
        %v1483 = vpow.pop %v1482
        %v1484 = vmul.f32 %v1359, 1.442695
        %v1485 = vpow.pop %v1484
        %v1486 = vmul.f32 %v1360, 1.442695
        %v1487 = vpow.pop %v1486
        %v1488 = vmul.f32 %v1361, 1.442695
        %v1489 = vpow.pop %v1488
        %1490 = vrot.lane.b32.xlu0 %v837, 32
        %v1491 = vpop.permute.xlu0 %1490
        %1492 = vrot.lane.b32.xlu0 %v841, 32
        %v1493 = vpop.permute.xlu0 %1492
        %1494 = vrot.lane.b32.xlu0 %v845, 32
        %v1495 = vpop.permute.xlu0 %1494
        %1496 = vrot.lane.b32.xlu0 %v849, 32
        %v1497 = vpop.permute.xlu0 %1496
        %1498 = vrot.lane.b32.xlu0 %v853, 32
        %v1499 = vpop.permute.xlu0 %1498
        %1500 = vrot.lane.b32.xlu0 %v857, 32
        %v1501 = vpop.permute.xlu0 %1500
        %1502 = vrot.lane.b32.xlu0 %v861, 32
        %v1503 = vpop.permute.xlu0 %1502
        %1504 = vrot.lane.b32.xlu0 %v865, 32
        %v1505 = vpop.permute.xlu0 %1504
        %1506 = vrot.lane.b32.xlu0 %v869, 32
        %v1507 = vpop.permute.xlu0 %1506
        %1508 = vrot.lane.b32.xlu0 %v873, 32
        %v1509 = vpop.permute.xlu0 %1508
        %1510 = vrot.lane.b32.xlu0 %v877, 32
        %v1511 = vpop.permute.xlu0 %1510
        %1512 = vrot.lane.b32.xlu0 %v881, 32
        %v1513 = vpop.permute.xlu0 %1512
        %1514 = vrot.lane.b32.xlu0 %v885, 32
        %v1515 = vpop.permute.xlu0 %1514
        %1516 = vrot.lane.b32.xlu0 %v889, 32
        %v1517 = vpop.permute.xlu0 %1516
        %1518 = vrot.lane.b32.xlu0 %v893, 32
        %v1519 = vpop.permute.xlu0 %1518
        %1520 = vrot.lane.b32.xlu0 %v897, 32
        %v1521 = vpop.permute.xlu0 %1520
        %v1538 = vmul.f32 %v1363, %v1491
        %v1539 = vmul.f32 %v1365, %v1491
        %v1540 = vmul.f32 %v1367, %v1491
        %v1541 = vmul.f32 %v1369, %v1491
        %v1542 = vmul.f32 %v1371, %v1493
        %v1543 = vmul.f32 %v1373, %v1493
        %v1544 = vmul.f32 %v1375, %v1493
        %v1545 = vmul.f32 %v1377, %v1493
        %v1546 = vmul.f32 %v1379, %v1495
        %v1547 = vmul.f32 %v1381, %v1495
        %v1548 = vmul.f32 %v1383, %v1495
        %v1549 = vmul.f32 %v1385, %v1495
        %v1550 = vmul.f32 %v1387, %v1497
        %v1551 = vmul.f32 %v1389, %v1497
        %v1552 = vmul.f32 %v1391, %v1497
        %v1553 = vmul.f32 %v1393, %v1497
        %v1554 = vmul.f32 %v1395, %v1499
        %v1555 = vmul.f32 %v1397, %v1499
        %v1556 = vmul.f32 %v1399, %v1499
        %v1557 = vmul.f32 %v1401, %v1499
        %v1558 = vmul.f32 %v1403, %v1501
        %v1559 = vmul.f32 %v1405, %v1501
        %v1560 = vmul.f32 %v1407, %v1501
        %v1561 = vmul.f32 %v1409, %v1501
        %v1562 = vmul.f32 %v1411, %v1503
        %v1563 = vmul.f32 %v1413, %v1503
        %v1564 = vmul.f32 %v1415, %v1503
        %v1565 = vmul.f32 %v1417, %v1503
        %v1566 = vmul.f32 %v1419, %v1505
        %v1567 = vmul.f32 %v1421, %v1505
        %v1568 = vmul.f32 %v1423, %v1505
        %v1569 = vmul.f32 %v1425, %v1505
        %v1570 = vmul.f32 %v1427, %v1507
        %v1571 = vmul.f32 %v1429, %v1507
        %v1572 = vmul.f32 %v1431, %v1507
        %v1573 = vmul.f32 %v1433, %v1507
        %v1574 = vmul.f32 %v1435, %v1509
        %v1575 = vmul.f32 %v1437, %v1509
        %v1576 = vmul.f32 %v1439, %v1509
        %v1577 = vmul.f32 %v1441, %v1509
        %v1578 = vmul.f32 %v1443, %v1511
        %v1579 = vmul.f32 %v1445, %v1511
        %v1580 = vmul.f32 %v1447, %v1511
        %v1581 = vmul.f32 %v1449, %v1511
        %v1582 = vmul.f32 %v1451, %v1513
        %v1583 = vmul.f32 %v1453, %v1513
        %v1584 = vmul.f32 %v1455, %v1513
        %v1585 = vmul.f32 %v1457, %v1513
        %v1586 = vmul.f32 %v1459, %v1515
        %v1587 = vmul.f32 %v1461, %v1515
        %v1588 = vmul.f32 %v1463, %v1515
        %v1589 = vmul.f32 %v1465, %v1515
        %v1590 = vmul.f32 %v1467, %v1517
        %v1591 = vmul.f32 %v1469, %v1517
        %v1592 = vmul.f32 %v1471, %v1517
        %v1593 = vmul.f32 %v1473, %v1517
        %v1594 = vmul.f32 %v1475, %v1519
        %v1595 = vmul.f32 %v1477, %v1519
        %v1596 = vmul.f32 %v1479, %v1519
        %v1597 = vmul.f32 %v1481, %v1519
        %v1598 = vmul.f32 %v1483, %v1521
        %v1599 = vmul.f32 %v1485, %v1521
        %v1600 = vmul.f32 %v1487, %v1521
        %v1601 = vmul.f32 %v1489, %v1521
        %1666 = vrot.lane.b32.xlu0 %v1538, 96
        %v1667 = vpop.permute.xlu0 %1666
        %1668 = vrot.lane.b32.xlu0 %v1539, 96
        %v1669 = vpop.permute.xlu0 %1668
        %1670 = vrot.lane.b32.xlu0 %v1540, 96
        %v1671 = vpop.permute.xlu0 %1670
        %1672 = vrot.lane.b32.xlu0 %v1541, 96
        %v1673 = vpop.permute.xlu0 %1672
        %1674 = vrot.lane.b32.xlu0 %v1542, 96
        %v1675 = vpop.permute.xlu0 %1674
        %1676 = vrot.lane.b32.xlu0 %v1543, 96
        %v1677 = vpop.permute.xlu0 %1676
        %1678 = vrot.lane.b32.xlu0 %v1544, 96
        %v1679 = vpop.permute.xlu0 %1678
        %1680 = vrot.lane.b32.xlu0 %v1545, 96
        %v1681 = vpop.permute.xlu0 %1680
        %1682 = vrot.lane.b32.xlu0 %v1546, 96
        %v1683 = vpop.permute.xlu0 %1682
        %1684 = vrot.lane.b32.xlu0 %v1547, 96
        %v1685 = vpop.permute.xlu0 %1684
        %1686 = vrot.lane.b32.xlu0 %v1548, 96
        %v1687 = vpop.permute.xlu0 %1686
        %1688 = vrot.lane.b32.xlu0 %v1549, 96
        %v1689 = vpop.permute.xlu0 %1688
        %1690 = vrot.lane.b32.xlu0 %v1550, 96
        %v1691 = vpop.permute.xlu0 %1690
        %1692 = vrot.lane.b32.xlu0 %v1551, 96
        %v1693 = vpop.permute.xlu0 %1692
        %1694 = vrot.lane.b32.xlu0 %v1552, 96
        %v1695 = vpop.permute.xlu0 %1694
        %1696 = vrot.lane.b32.xlu0 %v1553, 96
        %v1697 = vpop.permute.xlu0 %1696
        %1698 = vrot.lane.b32.xlu0 %v1554, 96
        %v1699 = vpop.permute.xlu0 %1698
        %1700 = vrot.lane.b32.xlu0 %v1555, 96
        %v1701 = vpop.permute.xlu0 %1700
        %1702 = vrot.lane.b32.xlu0 %v1556, 96
        %v1703 = vpop.permute.xlu0 %1702
        %1704 = vrot.lane.b32.xlu0 %v1557, 96
        %v1705 = vpop.permute.xlu0 %1704
        %1706 = vrot.lane.b32.xlu0 %v1558, 96
        %v1707 = vpop.permute.xlu0 %1706
        %1708 = vrot.lane.b32.xlu0 %v1559, 96
        %v1709 = vpop.permute.xlu0 %1708
        %1710 = vrot.lane.b32.xlu0 %v1560, 96
        %v1711 = vpop.permute.xlu0 %1710
        %1712 = vrot.lane.b32.xlu0 %v1561, 96
        %v1713 = vpop.permute.xlu0 %1712
        %1714 = vrot.lane.b32.xlu0 %v1562, 96
        %v1715 = vpop.permute.xlu0 %1714
        %1716 = vrot.lane.b32.xlu0 %v1563, 96
        %v1717 = vpop.permute.xlu0 %1716
        %1718 = vrot.lane.b32.xlu0 %v1564, 96
        %v1719 = vpop.permute.xlu0 %1718
        %1720 = vrot.lane.b32.xlu0 %v1565, 96
        %v1721 = vpop.permute.xlu0 %1720
        %1722 = vrot.lane.b32.xlu0 %v1566, 96
        %v1723 = vpop.permute.xlu0 %1722
        %1724 = vrot.lane.b32.xlu0 %v1567, 96
        %v1725 = vpop.permute.xlu0 %1724
        %1726 = vrot.lane.b32.xlu0 %v1568, 96
        %v1727 = vpop.permute.xlu0 %1726
        %1728 = vrot.lane.b32.xlu0 %v1569, 96
        %v1729 = vpop.permute.xlu0 %1728
        %1730 = vrot.lane.b32.xlu0 %v1570, 96
        %v1731 = vpop.permute.xlu0 %1730
        %1732 = vrot.lane.b32.xlu0 %v1571, 96
        %v1733 = vpop.permute.xlu0 %1732
        %1734 = vrot.lane.b32.xlu0 %v1572, 96
        %v1735 = vpop.permute.xlu0 %1734
        %1736 = vrot.lane.b32.xlu0 %v1573, 96
        %v1737 = vpop.permute.xlu0 %1736
        %1738 = vrot.lane.b32.xlu0 %v1574, 96
        %v1739 = vpop.permute.xlu0 %1738
        %1740 = vrot.lane.b32.xlu0 %v1575, 96
        %v1741 = vpop.permute.xlu0 %1740
        %1742 = vrot.lane.b32.xlu0 %v1576, 96
        %v1743 = vpop.permute.xlu0 %1742
        %1744 = vrot.lane.b32.xlu0 %v1577, 96
        %v1745 = vpop.permute.xlu0 %1744
        %1746 = vrot.lane.b32.xlu0 %v1578, 96
        %v1747 = vpop.permute.xlu0 %1746
        %1748 = vrot.lane.b32.xlu0 %v1579, 96
        %v1749 = vpop.permute.xlu0 %1748
        %1750 = vrot.lane.b32.xlu0 %v1580, 96
        %v1751 = vpop.permute.xlu0 %1750
        %1752 = vrot.lane.b32.xlu0 %v1581, 96
        %v1753 = vpop.permute.xlu0 %1752
        %1754 = vrot.lane.b32.xlu0 %v1582, 96
        %v1755 = vpop.permute.xlu0 %1754
        %1756 = vrot.lane.b32.xlu0 %v1583, 96
        %v1757 = vpop.permute.xlu0 %1756
        %1758 = vrot.lane.b32.xlu0 %v1584, 96
        %v1759 = vpop.permute.xlu0 %1758
        %1760 = vrot.lane.b32.xlu0 %v1585, 96
        %v1761 = vpop.permute.xlu0 %1760
        %1762 = vrot.lane.b32.xlu0 %v1586, 96
        %v1763 = vpop.permute.xlu0 %1762
        %1764 = vrot.lane.b32.xlu0 %v1587, 96
        %v1765 = vpop.permute.xlu0 %1764
        %1766 = vrot.lane.b32.xlu0 %v1588, 96
        %v1767 = vpop.permute.xlu0 %1766
        %1768 = vrot.lane.b32.xlu0 %v1589, 96
        %v1769 = vpop.permute.xlu0 %1768
        %1770 = vrot.lane.b32.xlu0 %v1590, 96
        %v1771 = vpop.permute.xlu0 %1770
        %1772 = vrot.lane.b32.xlu0 %v1591, 96
        %v1773 = vpop.permute.xlu0 %1772
        %1774 = vrot.lane.b32.xlu0 %v1592, 96
        %v1775 = vpop.permute.xlu0 %1774
        %1776 = vrot.lane.b32.xlu0 %v1593, 96
        %v1777 = vpop.permute.xlu0 %1776
        %1778 = vrot.lane.b32.xlu0 %v1594, 96
        %v1779 = vpop.permute.xlu0 %1778
        %1780 = vrot.lane.b32.xlu0 %v1595, 96
        %v1781 = vpop.permute.xlu0 %1780
        %1782 = vrot.lane.b32.xlu0 %v1596, 96
        %v1783 = vpop.permute.xlu0 %1782
        %1784 = vrot.lane.b32.xlu0 %v1597, 96
        %v1785 = vpop.permute.xlu0 %1784
        %1786 = vrot.lane.b32.xlu0 %v1598, 96
        %v1787 = vpop.permute.xlu0 %1786
        %1788 = vrot.lane.b32.xlu0 %v1599, 96
        %v1789 = vpop.permute.xlu0 %1788
        %1790 = vrot.lane.b32.xlu0 %v1600, 96
        %v1791 = vpop.permute.xlu0 %1790
        %1792 = vrot.lane.b32.xlu0 %v1601, 96
        %v1793 = vpop.permute.xlu0 %1792
        %vm1858 = vcmask 261120
        %v1859 = vsel %vm1858, %v1667, 0.0
        %1860 = vadd.xlane.f32.xlu0 %v1859
        %v1861 = vpop.xlane.xlu0 %1860
        %v1862 = vsel %vm1858, %v1669, 0.0
        %1863 = vadd.xlane.f32.xlu0 %v1862
        %v1864 = vpop.xlane.xlu0 %1863
        %v1865 = vsel %vm1858, %v1671, 0.0
        %1866 = vadd.xlane.f32.xlu0 %v1865
        %v1867 = vpop.xlane.xlu0 %1866
        %v1868 = vsel %vm1858, %v1673, 0.0
        %1869 = vadd.xlane.f32.xlu0 %v1868
        %v1870 = vpop.xlane.xlu0 %1869
        %v1871 = vsel %vm1858, %v1675, 0.0
        %1872 = vadd.xlane.f32.xlu0 %v1871
        %v1873 = vpop.xlane.xlu0 %1872
        %v1874 = vsel %vm1858, %v1677, 0.0
        %1875 = vadd.xlane.f32.xlu0 %v1874
        %v1876 = vpop.xlane.xlu0 %1875
        %v1877 = vsel %vm1858, %v1679, 0.0
        %1878 = vadd.xlane.f32.xlu0 %v1877
        %v1879 = vpop.xlane.xlu0 %1878
        %v1880 = vsel %vm1858, %v1681, 0.0
        %1881 = vadd.xlane.f32.xlu0 %v1880
        %v1882 = vpop.xlane.xlu0 %1881
        %v1883 = vsel %vm1858, %v1683, 0.0
        %1884 = vadd.xlane.f32.xlu0 %v1883
        %v1885 = vpop.xlane.xlu0 %1884
        %v1886 = vsel %vm1858, %v1685, 0.0
        %1887 = vadd.xlane.f32.xlu0 %v1886
        %v1888 = vpop.xlane.xlu0 %1887
        %v1889 = vsel %vm1858, %v1687, 0.0
        %1890 = vadd.xlane.f32.xlu0 %v1889
        %v1891 = vpop.xlane.xlu0 %1890
        %v1892 = vsel %vm1858, %v1689, 0.0
        %1893 = vadd.xlane.f32.xlu0 %v1892
        %v1894 = vpop.xlane.xlu0 %1893
        %v1895 = vsel %vm1858, %v1691, 0.0
        %1896 = vadd.xlane.f32.xlu0 %v1895
        %v1897 = vpop.xlane.xlu0 %1896
        %v1898 = vsel %vm1858, %v1693, 0.0
        %1899 = vadd.xlane.f32.xlu0 %v1898
        %v1900 = vpop.xlane.xlu0 %1899
        %v1901 = vsel %vm1858, %v1695, 0.0
        %1902 = vadd.xlane.f32.xlu0 %v1901
        %v1903 = vpop.xlane.xlu0 %1902
        %v1904 = vsel %vm1858, %v1697, 0.0
        %1905 = vadd.xlane.f32.xlu0 %v1904
        %v1906 = vpop.xlane.xlu0 %1905
        %v1907 = vsel %vm1858, %v1699, 0.0
        %1908 = vadd.xlane.f32.xlu0 %v1907
        %v1909 = vpop.xlane.xlu0 %1908
        %v1910 = vsel %vm1858, %v1701, 0.0
        %1911 = vadd.xlane.f32.xlu0 %v1910
        %v1912 = vpop.xlane.xlu0 %1911
        %v1913 = vsel %vm1858, %v1703, 0.0
        %1914 = vadd.xlane.f32.xlu0 %v1913
        %v1915 = vpop.xlane.xlu0 %1914
        %v1916 = vsel %vm1858, %v1705, 0.0
        %1917 = vadd.xlane.f32.xlu0 %v1916
        %v1918 = vpop.xlane.xlu0 %1917
        %v1919 = vsel %vm1858, %v1707, 0.0
        %1920 = vadd.xlane.f32.xlu0 %v1919
        %v1921 = vpop.xlane.xlu0 %1920
        %v1922 = vsel %vm1858, %v1709, 0.0
        %1923 = vadd.xlane.f32.xlu0 %v1922
        %v1924 = vpop.xlane.xlu0 %1923
        %v1925 = vsel %vm1858, %v1711, 0.0
        %1926 = vadd.xlane.f32.xlu0 %v1925
        %v1927 = vpop.xlane.xlu0 %1926
        %v1928 = vsel %vm1858, %v1713, 0.0
        %1929 = vadd.xlane.f32.xlu0 %v1928
        %v1930 = vpop.xlane.xlu0 %1929
        %v1931 = vsel %vm1858, %v1715, 0.0
        %1932 = vadd.xlane.f32.xlu0 %v1931
        %v1933 = vpop.xlane.xlu0 %1932
        %v1934 = vsel %vm1858, %v1717, 0.0
        %1935 = vadd.xlane.f32.xlu0 %v1934
        %v1936 = vpop.xlane.xlu0 %1935
        %v1937 = vsel %vm1858, %v1719, 0.0
        %1938 = vadd.xlane.f32.xlu0 %v1937
        %v1939 = vpop.xlane.xlu0 %1938
        %v1940 = vsel %vm1858, %v1721, 0.0
        %1941 = vadd.xlane.f32.xlu0 %v1940
        %v1942 = vpop.xlane.xlu0 %1941
        %v1943 = vsel %vm1858, %v1723, 0.0
        %1944 = vadd.xlane.f32.xlu0 %v1943
        %v1945 = vpop.xlane.xlu0 %1944
        %v1946 = vsel %vm1858, %v1725, 0.0
        %1947 = vadd.xlane.f32.xlu0 %v1946
        %v1948 = vpop.xlane.xlu0 %1947
        %v1949 = vsel %vm1858, %v1727, 0.0
        %1950 = vadd.xlane.f32.xlu0 %v1949
        %v1951 = vpop.xlane.xlu0 %1950
        %v1952 = vsel %vm1858, %v1729, 0.0
        %1953 = vadd.xlane.f32.xlu0 %v1952
        %v1954 = vpop.xlane.xlu0 %1953
        %v1955 = vsel %vm1858, %v1731, 0.0
        %1956 = vadd.xlane.f32.xlu0 %v1955
        %v1957 = vpop.xlane.xlu0 %1956
        %v1958 = vsel %vm1858, %v1733, 0.0
        %1959 = vadd.xlane.f32.xlu0 %v1958
        %v1960 = vpop.xlane.xlu0 %1959
        %v1961 = vsel %vm1858, %v1735, 0.0
        %1962 = vadd.xlane.f32.xlu0 %v1961
        %v1963 = vpop.xlane.xlu0 %1962
        %v1964 = vsel %vm1858, %v1737, 0.0
        %1965 = vadd.xlane.f32.xlu0 %v1964
        %v1966 = vpop.xlane.xlu0 %1965
        %v1967 = vsel %vm1858, %v1739, 0.0
        %1968 = vadd.xlane.f32.xlu0 %v1967
        %v1969 = vpop.xlane.xlu0 %1968
        %v1970 = vsel %vm1858, %v1741, 0.0
        %1971 = vadd.xlane.f32.xlu0 %v1970
        %v1972 = vpop.xlane.xlu0 %1971
        %v1973 = vsel %vm1858, %v1743, 0.0
        %1974 = vadd.xlane.f32.xlu0 %v1973
        %v1975 = vpop.xlane.xlu0 %1974
        %v1976 = vsel %vm1858, %v1745, 0.0
        %1977 = vadd.xlane.f32.xlu0 %v1976
        %v1978 = vpop.xlane.xlu0 %1977
        %v1979 = vsel %vm1858, %v1747, 0.0
        %1980 = vadd.xlane.f32.xlu0 %v1979
        %v1981 = vpop.xlane.xlu0 %1980
        %v1982 = vsel %vm1858, %v1749, 0.0
        %1983 = vadd.xlane.f32.xlu0 %v1982
        %v1984 = vpop.xlane.xlu0 %1983
        %v1985 = vsel %vm1858, %v1751, 0.0
        %1986 = vadd.xlane.f32.xlu0 %v1985
        %v1987 = vpop.xlane.xlu0 %1986
        %v1988 = vsel %vm1858, %v1753, 0.0
        %1989 = vadd.xlane.f32.xlu0 %v1988
        %v1990 = vpop.xlane.xlu0 %1989
        %v1991 = vsel %vm1858, %v1755, 0.0
        %1992 = vadd.xlane.f32.xlu0 %v1991
        %v1993 = vpop.xlane.xlu0 %1992
        %v1994 = vsel %vm1858, %v1757, 0.0
        %1995 = vadd.xlane.f32.xlu0 %v1994
        %v1996 = vpop.xlane.xlu0 %1995
        %v1997 = vsel %vm1858, %v1759, 0.0
        %1998 = vadd.xlane.f32.xlu0 %v1997
        %v1999 = vpop.xlane.xlu0 %1998
        %v2000 = vsel %vm1858, %v1761, 0.0
        %2001 = vadd.xlane.f32.xlu0 %v2000
        %v2002 = vpop.xlane.xlu0 %2001
        %v2003 = vsel %vm1858, %v1763, 0.0
        %2004 = vadd.xlane.f32.xlu0 %v2003
        %v2005 = vpop.xlane.xlu0 %2004
        %v2006 = vsel %vm1858, %v1765, 0.0
        %2007 = vadd.xlane.f32.xlu0 %v2006
        %v2008 = vpop.xlane.xlu0 %2007
        %v2009 = vsel %vm1858, %v1767, 0.0
        %2010 = vadd.xlane.f32.xlu0 %v2009
        %v2011 = vpop.xlane.xlu0 %2010
        %v2012 = vsel %vm1858, %v1769, 0.0
        %2013 = vadd.xlane.f32.xlu0 %v2012
        %v2014 = vpop.xlane.xlu0 %2013
        %v2015 = vsel %vm1858, %v1771, 0.0
        %2016 = vadd.xlane.f32.xlu0 %v2015
        %v2017 = vpop.xlane.xlu0 %2016
        %v2018 = vsel %vm1858, %v1773, 0.0
        %2019 = vadd.xlane.f32.xlu0 %v2018
        %v2020 = vpop.xlane.xlu0 %2019
        %v2021 = vsel %vm1858, %v1775, 0.0
        %2022 = vadd.xlane.f32.xlu0 %v2021
        %v2023 = vpop.xlane.xlu0 %2022
        %v2024 = vsel %vm1858, %v1777, 0.0
        %2025 = vadd.xlane.f32.xlu0 %v2024
        %v2026 = vpop.xlane.xlu0 %2025
        %v2027 = vsel %vm1858, %v1779, 0.0
        %2028 = vadd.xlane.f32.xlu0 %v2027
        %v2029 = vpop.xlane.xlu0 %2028
        %v2030 = vsel %vm1858, %v1781, 0.0
        %2031 = vadd.xlane.f32.xlu0 %v2030
        %v2032 = vpop.xlane.xlu0 %2031
        %v2033 = vsel %vm1858, %v1783, 0.0
        %2034 = vadd.xlane.f32.xlu0 %v2033
        %v2035 = vpop.xlane.xlu0 %2034
        %v2036 = vsel %vm1858, %v1785, 0.0
        %2037 = vadd.xlane.f32.xlu0 %v2036
        %v2038 = vpop.xlane.xlu0 %2037
        %v2039 = vsel %vm1858, %v1787, 0.0
        %2040 = vadd.xlane.f32.xlu0 %v2039
        %v2041 = vpop.xlane.xlu0 %2040
        %v2042 = vsel %vm1858, %v1789, 0.0
        %2043 = vadd.xlane.f32.xlu0 %v2042
        %v2044 = vpop.xlane.xlu0 %2043
        %v2045 = vsel %vm1858, %v1791, 0.0
        %2046 = vadd.xlane.f32.xlu0 %v2045
        %v2047 = vpop.xlane.xlu0 %2046
        %v2048 = vsel %vm1858, %v1793, 0.0
        %2049 = vadd.xlane.f32.xlu0 %v2048
        %v2050 = vpop.xlane.xlu0 %2049
        %2115 = vrot.lane.b32.xlu0 %v1363, 96
        %v2116 = vpop.permute.xlu0 %2115
        %2117 = vrot.lane.b32.xlu0 %v1365, 96
        %v2118 = vpop.permute.xlu0 %2117
        %2119 = vrot.lane.b32.xlu0 %v1367, 96
        %v2120 = vpop.permute.xlu0 %2119
        %2121 = vrot.lane.b32.xlu0 %v1369, 96
        %v2122 = vpop.permute.xlu0 %2121
        %2123 = vrot.lane.b32.xlu0 %v1371, 96
        %v2124 = vpop.permute.xlu0 %2123
        %2125 = vrot.lane.b32.xlu0 %v1373, 96
        %v2126 = vpop.permute.xlu0 %2125
        %2127 = vrot.lane.b32.xlu0 %v1375, 96
        %v2128 = vpop.permute.xlu0 %2127
        %2129 = vrot.lane.b32.xlu0 %v1377, 96
        %v2130 = vpop.permute.xlu0 %2129
        %2131 = vrot.lane.b32.xlu0 %v1379, 96
        %v2132 = vpop.permute.xlu0 %2131
        %2133 = vrot.lane.b32.xlu0 %v1381, 96
        %v2134 = vpop.permute.xlu0 %2133
        %2135 = vrot.lane.b32.xlu0 %v1383, 96
        %v2136 = vpop.permute.xlu0 %2135
        %2137 = vrot.lane.b32.xlu0 %v1385, 96
        %v2138 = vpop.permute.xlu0 %2137
        %2139 = vrot.lane.b32.xlu0 %v1387, 96
        %v2140 = vpop.permute.xlu0 %2139
        %2141 = vrot.lane.b32.xlu0 %v1389, 96
        %v2142 = vpop.permute.xlu0 %2141
        %2143 = vrot.lane.b32.xlu0 %v1391, 96
        %v2144 = vpop.permute.xlu0 %2143
        %2145 = vrot.lane.b32.xlu0 %v1393, 96
        %v2146 = vpop.permute.xlu0 %2145
        %2147 = vrot.lane.b32.xlu0 %v1395, 96
        %v2148 = vpop.permute.xlu0 %2147
        %2149 = vrot.lane.b32.xlu0 %v1397, 96
        %v2150 = vpop.permute.xlu0 %2149
        %2151 = vrot.lane.b32.xlu0 %v1399, 96
        %v2152 = vpop.permute.xlu0 %2151
        %2153 = vrot.lane.b32.xlu0 %v1401, 96
        %v2154 = vpop.permute.xlu0 %2153
        %2155 = vrot.lane.b32.xlu0 %v1403, 96
        %v2156 = vpop.permute.xlu0 %2155
        %2157 = vrot.lane.b32.xlu0 %v1405, 96
        %v2158 = vpop.permute.xlu0 %2157
        %2159 = vrot.lane.b32.xlu0 %v1407, 96
        %v2160 = vpop.permute.xlu0 %2159
        %2161 = vrot.lane.b32.xlu0 %v1409, 96
        %v2162 = vpop.permute.xlu0 %2161
        %2163 = vrot.lane.b32.xlu0 %v1411, 96
        %v2164 = vpop.permute.xlu0 %2163
        %2165 = vrot.lane.b32.xlu0 %v1413, 96
        %v2166 = vpop.permute.xlu0 %2165
        %2167 = vrot.lane.b32.xlu0 %v1415, 96
        %v2168 = vpop.permute.xlu0 %2167
        %2169 = vrot.lane.b32.xlu0 %v1417, 96
        %v2170 = vpop.permute.xlu0 %2169
        %2171 = vrot.lane.b32.xlu0 %v1419, 96
        %v2172 = vpop.permute.xlu0 %2171
        %2173 = vrot.lane.b32.xlu0 %v1421, 96
        %v2174 = vpop.permute.xlu0 %2173
        %2175 = vrot.lane.b32.xlu0 %v1423, 96
        %v2176 = vpop.permute.xlu0 %2175
        %2177 = vrot.lane.b32.xlu0 %v1425, 96
        %v2178 = vpop.permute.xlu0 %2177
        %2179 = vrot.lane.b32.xlu0 %v1427, 96
        %v2180 = vpop.permute.xlu0 %2179
        %2181 = vrot.lane.b32.xlu0 %v1429, 96
        %v2182 = vpop.permute.xlu0 %2181
        %2183 = vrot.lane.b32.xlu0 %v1431, 96
        %v2184 = vpop.permute.xlu0 %2183
        %2185 = vrot.lane.b32.xlu0 %v1433, 96
        %v2186 = vpop.permute.xlu0 %2185
        %2187 = vrot.lane.b32.xlu0 %v1435, 96
        %v2188 = vpop.permute.xlu0 %2187
        %2189 = vrot.lane.b32.xlu0 %v1437, 96
        %v2190 = vpop.permute.xlu0 %2189
        %2191 = vrot.lane.b32.xlu0 %v1439, 96
        %v2192 = vpop.permute.xlu0 %2191
        %2193 = vrot.lane.b32.xlu0 %v1441, 96
        %v2194 = vpop.permute.xlu0 %2193
        %2195 = vrot.lane.b32.xlu0 %v1443, 96
        %v2196 = vpop.permute.xlu0 %2195
        %2197 = vrot.lane.b32.xlu0 %v1445, 96
        %v2198 = vpop.permute.xlu0 %2197
        %2199 = vrot.lane.b32.xlu0 %v1447, 96
        %v2200 = vpop.permute.xlu0 %2199
        %2201 = vrot.lane.b32.xlu0 %v1449, 96
        %v2202 = vpop.permute.xlu0 %2201
        %2203 = vrot.lane.b32.xlu0 %v1451, 96
        %v2204 = vpop.permute.xlu0 %2203
        %2205 = vrot.lane.b32.xlu0 %v1453, 96
        %v2206 = vpop.permute.xlu0 %2205
        %2207 = vrot.lane.b32.xlu0 %v1455, 96
        %v2208 = vpop.permute.xlu0 %2207
        %2209 = vrot.lane.b32.xlu0 %v1457, 96
        %v2210 = vpop.permute.xlu0 %2209
        %2211 = vrot.lane.b32.xlu0 %v1459, 96
        %v2212 = vpop.permute.xlu0 %2211
        %2213 = vrot.lane.b32.xlu0 %v1461, 96
        %v2214 = vpop.permute.xlu0 %2213
        %2215 = vrot.lane.b32.xlu0 %v1463, 96
        %v2216 = vpop.permute.xlu0 %2215
        %2217 = vrot.lane.b32.xlu0 %v1465, 96
        %v2218 = vpop.permute.xlu0 %2217
        %2219 = vrot.lane.b32.xlu0 %v1467, 96
        %v2220 = vpop.permute.xlu0 %2219
        %2221 = vrot.lane.b32.xlu0 %v1469, 96
        %v2222 = vpop.permute.xlu0 %2221
        %2223 = vrot.lane.b32.xlu0 %v1471, 96
        %v2224 = vpop.permute.xlu0 %2223
        %2225 = vrot.lane.b32.xlu0 %v1473, 96
        %v2226 = vpop.permute.xlu0 %2225
        %2227 = vrot.lane.b32.xlu0 %v1475, 96
        %v2228 = vpop.permute.xlu0 %2227
        %2229 = vrot.lane.b32.xlu0 %v1477, 96
        %v2230 = vpop.permute.xlu0 %2229
        %2231 = vrot.lane.b32.xlu0 %v1479, 96
        %v2232 = vpop.permute.xlu0 %2231
        %2233 = vrot.lane.b32.xlu0 %v1481, 96
        %v2234 = vpop.permute.xlu0 %2233
        %2235 = vrot.lane.b32.xlu0 %v1483, 96
        %v2236 = vpop.permute.xlu0 %2235
        %2237 = vrot.lane.b32.xlu0 %v1485, 96
        %v2238 = vpop.permute.xlu0 %2237
        %2239 = vrot.lane.b32.xlu0 %v1487, 96
        %v2240 = vpop.permute.xlu0 %2239
        %2241 = vrot.lane.b32.xlu0 %v1489, 96
        %v2242 = vpop.permute.xlu0 %2241
        %v2307 = vsel %vm1858, %v2116, 0.0
        %2308 = vadd.xlane.f32.xlu0 %v2307
        %v2309 = vpop.xlane.xlu0 %2308
        %v2310 = vsel %vm1858, %v2118, 0.0
        %2311 = vadd.xlane.f32.xlu0 %v2310
        %v2312 = vpop.xlane.xlu0 %2311
        %v2313 = vsel %vm1858, %v2120, 0.0
        %2314 = vadd.xlane.f32.xlu0 %v2313
        %v2315 = vpop.xlane.xlu0 %2314
        %v2316 = vsel %vm1858, %v2122, 0.0
        %2317 = vadd.xlane.f32.xlu0 %v2316
        %v2318 = vpop.xlane.xlu0 %2317
        %v2319 = vsel %vm1858, %v2124, 0.0
        %2320 = vadd.xlane.f32.xlu0 %v2319
        %v2321 = vpop.xlane.xlu0 %2320
        %v2322 = vsel %vm1858, %v2126, 0.0
        %2323 = vadd.xlane.f32.xlu0 %v2322
        %v2324 = vpop.xlane.xlu0 %2323
        %v2325 = vsel %vm1858, %v2128, 0.0
        %2326 = vadd.xlane.f32.xlu0 %v2325
        %v2327 = vpop.xlane.xlu0 %2326
        %v2328 = vsel %vm1858, %v2130, 0.0
        %2329 = vadd.xlane.f32.xlu0 %v2328
        %v2330 = vpop.xlane.xlu0 %2329
        %v2331 = vsel %vm1858, %v2132, 0.0
        %2332 = vadd.xlane.f32.xlu0 %v2331
        %v2333 = vpop.xlane.xlu0 %2332
        %v2334 = vsel %vm1858, %v2134, 0.0
        %2335 = vadd.xlane.f32.xlu0 %v2334
        %v2336 = vpop.xlane.xlu0 %2335
        %v2337 = vsel %vm1858, %v2136, 0.0
        %2338 = vadd.xlane.f32.xlu0 %v2337
        %v2339 = vpop.xlane.xlu0 %2338
        %v2340 = vsel %vm1858, %v2138, 0.0
        %2341 = vadd.xlane.f32.xlu0 %v2340
        %v2342 = vpop.xlane.xlu0 %2341
        %v2343 = vsel %vm1858, %v2140, 0.0
        %2344 = vadd.xlane.f32.xlu0 %v2343
        %v2345 = vpop.xlane.xlu0 %2344
        %v2346 = vsel %vm1858, %v2142, 0.0
        %2347 = vadd.xlane.f32.xlu0 %v2346
        %v2348 = vpop.xlane.xlu0 %2347
        %v2349 = vsel %vm1858, %v2144, 0.0
        %2350 = vadd.xlane.f32.xlu0 %v2349
        %v2351 = vpop.xlane.xlu0 %2350
        %v2352 = vsel %vm1858, %v2146, 0.0
        %2353 = vadd.xlane.f32.xlu0 %v2352
        %v2354 = vpop.xlane.xlu0 %2353
        %v2355 = vsel %vm1858, %v2148, 0.0
        %2356 = vadd.xlane.f32.xlu0 %v2355
        %v2357 = vpop.xlane.xlu0 %2356
        %v2358 = vsel %vm1858, %v2150, 0.0
        %2359 = vadd.xlane.f32.xlu0 %v2358
        %v2360 = vpop.xlane.xlu0 %2359
        %v2361 = vsel %vm1858, %v2152, 0.0
        %2362 = vadd.xlane.f32.xlu0 %v2361
        %v2363 = vpop.xlane.xlu0 %2362
        %v2364 = vsel %vm1858, %v2154, 0.0
        %2365 = vadd.xlane.f32.xlu0 %v2364
        %v2366 = vpop.xlane.xlu0 %2365
        %v2367 = vsel %vm1858, %v2156, 0.0
        %2368 = vadd.xlane.f32.xlu0 %v2367
        %v2369 = vpop.xlane.xlu0 %2368
        %v2370 = vsel %vm1858, %v2158, 0.0
        %2371 = vadd.xlane.f32.xlu0 %v2370
        %v2372 = vpop.xlane.xlu0 %2371
        %v2373 = vsel %vm1858, %v2160, 0.0
        %2374 = vadd.xlane.f32.xlu0 %v2373
        %v2375 = vpop.xlane.xlu0 %2374
        %v2376 = vsel %vm1858, %v2162, 0.0
        %2377 = vadd.xlane.f32.xlu0 %v2376
        %v2378 = vpop.xlane.xlu0 %2377
        %v2379 = vsel %vm1858, %v2164, 0.0
        %2380 = vadd.xlane.f32.xlu0 %v2379
        %v2381 = vpop.xlane.xlu0 %2380
        %v2382 = vsel %vm1858, %v2166, 0.0
        %2383 = vadd.xlane.f32.xlu0 %v2382
        %v2384 = vpop.xlane.xlu0 %2383
        %v2385 = vsel %vm1858, %v2168, 0.0
        %2386 = vadd.xlane.f32.xlu0 %v2385
        %v2387 = vpop.xlane.xlu0 %2386
        %v2388 = vsel %vm1858, %v2170, 0.0
        %2389 = vadd.xlane.f32.xlu0 %v2388
        %v2390 = vpop.xlane.xlu0 %2389
        %v2391 = vsel %vm1858, %v2172, 0.0
        %2392 = vadd.xlane.f32.xlu0 %v2391
        %v2393 = vpop.xlane.xlu0 %2392
        %v2394 = vsel %vm1858, %v2174, 0.0
        %2395 = vadd.xlane.f32.xlu0 %v2394
        %v2396 = vpop.xlane.xlu0 %2395
        %v2397 = vsel %vm1858, %v2176, 0.0
        %2398 = vadd.xlane.f32.xlu0 %v2397
        %v2399 = vpop.xlane.xlu0 %2398
        %v2400 = vsel %vm1858, %v2178, 0.0
        %2401 = vadd.xlane.f32.xlu0 %v2400
        %v2402 = vpop.xlane.xlu0 %2401
        %v2403 = vsel %vm1858, %v2180, 0.0
        %2404 = vadd.xlane.f32.xlu0 %v2403
        %v2405 = vpop.xlane.xlu0 %2404
        %v2406 = vsel %vm1858, %v2182, 0.0
        %2407 = vadd.xlane.f32.xlu0 %v2406
        %v2408 = vpop.xlane.xlu0 %2407
        %v2409 = vsel %vm1858, %v2184, 0.0
        %2410 = vadd.xlane.f32.xlu0 %v2409
        %v2411 = vpop.xlane.xlu0 %2410
        %v2412 = vsel %vm1858, %v2186, 0.0
        %2413 = vadd.xlane.f32.xlu0 %v2412
        %v2414 = vpop.xlane.xlu0 %2413
        %v2415 = vsel %vm1858, %v2188, 0.0
        %2416 = vadd.xlane.f32.xlu0 %v2415
        %v2417 = vpop.xlane.xlu0 %2416
        %v2418 = vsel %vm1858, %v2190, 0.0
        %2419 = vadd.xlane.f32.xlu0 %v2418
        %v2420 = vpop.xlane.xlu0 %2419
        %v2421 = vsel %vm1858, %v2192, 0.0
        %2422 = vadd.xlane.f32.xlu0 %v2421
        %v2423 = vpop.xlane.xlu0 %2422
        %v2424 = vsel %vm1858, %v2194, 0.0
        %2425 = vadd.xlane.f32.xlu0 %v2424
        %v2426 = vpop.xlane.xlu0 %2425
        %v2427 = vsel %vm1858, %v2196, 0.0
        %2428 = vadd.xlane.f32.xlu0 %v2427
        %v2429 = vpop.xlane.xlu0 %2428
        %v2430 = vsel %vm1858, %v2198, 0.0
        %2431 = vadd.xlane.f32.xlu0 %v2430
        %v2432 = vpop.xlane.xlu0 %2431
        %v2433 = vsel %vm1858, %v2200, 0.0
        %2434 = vadd.xlane.f32.xlu0 %v2433
        %v2435 = vpop.xlane.xlu0 %2434
        %v2436 = vsel %vm1858, %v2202, 0.0
        %2437 = vadd.xlane.f32.xlu0 %v2436
        %v2438 = vpop.xlane.xlu0 %2437
        %v2439 = vsel %vm1858, %v2204, 0.0
        %2440 = vadd.xlane.f32.xlu0 %v2439
        %v2441 = vpop.xlane.xlu0 %2440
        %v2442 = vsel %vm1858, %v2206, 0.0
        %2443 = vadd.xlane.f32.xlu0 %v2442
        %v2444 = vpop.xlane.xlu0 %2443
        %v2445 = vsel %vm1858, %v2208, 0.0
        %2446 = vadd.xlane.f32.xlu0 %v2445
        %v2447 = vpop.xlane.xlu0 %2446
        %v2448 = vsel %vm1858, %v2210, 0.0
        %2449 = vadd.xlane.f32.xlu0 %v2448
        %v2450 = vpop.xlane.xlu0 %2449
        %v2451 = vsel %vm1858, %v2212, 0.0
        %2452 = vadd.xlane.f32.xlu0 %v2451
        %v2453 = vpop.xlane.xlu0 %2452
        %v2454 = vsel %vm1858, %v2214, 0.0
        %2455 = vadd.xlane.f32.xlu0 %v2454
        %v2456 = vpop.xlane.xlu0 %2455
        %v2457 = vsel %vm1858, %v2216, 0.0
        %2458 = vadd.xlane.f32.xlu0 %v2457
        %v2459 = vpop.xlane.xlu0 %2458
        %v2460 = vsel %vm1858, %v2218, 0.0
        %2461 = vadd.xlane.f32.xlu0 %v2460
        %v2462 = vpop.xlane.xlu0 %2461
        %v2463 = vsel %vm1858, %v2220, 0.0
        %2464 = vadd.xlane.f32.xlu0 %v2463
        %v2465 = vpop.xlane.xlu0 %2464
        %v2466 = vsel %vm1858, %v2222, 0.0
        %2467 = vadd.xlane.f32.xlu0 %v2466
        %v2468 = vpop.xlane.xlu0 %2467
        %v2469 = vsel %vm1858, %v2224, 0.0
        %2470 = vadd.xlane.f32.xlu0 %v2469
        %v2471 = vpop.xlane.xlu0 %2470
        %v2472 = vsel %vm1858, %v2226, 0.0
        %2473 = vadd.xlane.f32.xlu0 %v2472
        %v2474 = vpop.xlane.xlu0 %2473
        %v2475 = vsel %vm1858, %v2228, 0.0
        %2476 = vadd.xlane.f32.xlu0 %v2475
        %v2477 = vpop.xlane.xlu0 %2476
        %v2478 = vsel %vm1858, %v2230, 0.0
        %2479 = vadd.xlane.f32.xlu0 %v2478
        %v2480 = vpop.xlane.xlu0 %2479
        %v2481 = vsel %vm1858, %v2232, 0.0
        %2482 = vadd.xlane.f32.xlu0 %v2481
        %v2483 = vpop.xlane.xlu0 %2482
        %v2484 = vsel %vm1858, %v2234, 0.0
        %2485 = vadd.xlane.f32.xlu0 %v2484
        %v2486 = vpop.xlane.xlu0 %2485
        %v2487 = vsel %vm1858, %v2236, 0.0
        %2488 = vadd.xlane.f32.xlu0 %v2487
        %v2489 = vpop.xlane.xlu0 %2488
        %v2490 = vsel %vm1858, %v2238, 0.0
        %2491 = vadd.xlane.f32.xlu0 %v2490
        %v2492 = vpop.xlane.xlu0 %2491
        %v2493 = vsel %vm1858, %v2240, 0.0
        %2494 = vadd.xlane.f32.xlu0 %v2493
        %v2495 = vpop.xlane.xlu0 %2494
        %v2496 = vsel %vm1858, %v2242, 0.0
        %2497 = vadd.xlane.f32.xlu0 %v2496
        %v2498 = vpop.xlane.xlu0 %2497
        %v2499 = vrcp.pop %v2309
        %v2500 = vrcp.pop %v2312
        %v2501 = vrcp.pop %v2315
        %v2502 = vrcp.pop %v2318
        %v2503 = vrcp.pop %v2321
        %v2504 = vrcp.pop %v2324
        %v2505 = vrcp.pop %v2327
        %v2506 = vrcp.pop %v2330
        %v2507 = vrcp.pop %v2333
        %v2508 = vrcp.pop %v2336
        %v2509 = vrcp.pop %v2339
        %v2510 = vrcp.pop %v2342
        %v2511 = vrcp.pop %v2345
        %v2512 = vrcp.pop %v2348
        %v2513 = vrcp.pop %v2351
        %v2514 = vrcp.pop %v2354
        %v2515 = vrcp.pop %v2357
        %v2516 = vrcp.pop %v2360
        %v2517 = vrcp.pop %v2363
        %v2518 = vrcp.pop %v2366
        %v2519 = vrcp.pop %v2369
        %v2520 = vrcp.pop %v2372
        %v2521 = vrcp.pop %v2375
        %v2522 = vrcp.pop %v2378
        %v2523 = vrcp.pop %v2381
        %v2524 = vrcp.pop %v2384
        %v2525 = vrcp.pop %v2387
        %v2526 = vrcp.pop %v2390
        %v2527 = vrcp.pop %v2393
        %v2528 = vrcp.pop %v2396
        %v2529 = vrcp.pop %v2399
        %v2530 = vrcp.pop %v2402
        %v2531 = vrcp.pop %v2405
        %v2532 = vrcp.pop %v2408
        %v2533 = vrcp.pop %v2411
        %v2534 = vrcp.pop %v2414
        %v2535 = vrcp.pop %v2417
        %v2536 = vrcp.pop %v2420
        %v2537 = vrcp.pop %v2423
        %v2538 = vrcp.pop %v2426
        %v2539 = vrcp.pop %v2429
        %v2540 = vrcp.pop %v2432
        %v2541 = vrcp.pop %v2435
        %v2542 = vrcp.pop %v2438
        %v2543 = vrcp.pop %v2441
        %v2544 = vrcp.pop %v2444
        %v2545 = vrcp.pop %v2447
        %v2546 = vrcp.pop %v2450
        %v2547 = vrcp.pop %v2453
        %v2548 = vrcp.pop %v2456
        %v2549 = vrcp.pop %v2459
        %v2550 = vrcp.pop %v2462
        %v2551 = vrcp.pop %v2465
        %v2552 = vrcp.pop %v2468
        %v2553 = vrcp.pop %v2471
        %v2554 = vrcp.pop %v2474
        %v2555 = vrcp.pop %v2477
        %v2556 = vrcp.pop %v2480
        %v2557 = vrcp.pop %v2483
        %v2558 = vrcp.pop %v2486
        %v2559 = vrcp.pop %v2489
        %v2560 = vrcp.pop %v2492
        %v2561 = vrcp.pop %v2495
        %v2562 = vrcp.pop %v2498
        %v2563 = vmul.f32 %v2309, %v2499
        %v2564 = vmul.f32 %v2312, %v2500
        %v2565 = vmul.f32 %v2315, %v2501
        %v2566 = vmul.f32 %v2318, %v2502
        %v2567 = vmul.f32 %v2321, %v2503
        %v2568 = vmul.f32 %v2324, %v2504
        %v2569 = vmul.f32 %v2327, %v2505
        %v2570 = vmul.f32 %v2330, %v2506
        %v2571 = vmul.f32 %v2333, %v2507
        %v2572 = vmul.f32 %v2336, %v2508
        %v2573 = vmul.f32 %v2339, %v2509
        %v2574 = vmul.f32 %v2342, %v2510
        %v2575 = vmul.f32 %v2345, %v2511
        %v2576 = vmul.f32 %v2348, %v2512
        %v2577 = vmul.f32 %v2351, %v2513
        %v2578 = vmul.f32 %v2354, %v2514
        %v2579 = vmul.f32 %v2357, %v2515
        %v2580 = vmul.f32 %v2360, %v2516
        %v2581 = vmul.f32 %v2363, %v2517
        %v2582 = vmul.f32 %v2366, %v2518
        %v2583 = vmul.f32 %v2369, %v2519
        %v2584 = vmul.f32 %v2372, %v2520
        %v2585 = vmul.f32 %v2375, %v2521
        %v2586 = vmul.f32 %v2378, %v2522
        %v2587 = vmul.f32 %v2381, %v2523
        %v2588 = vmul.f32 %v2384, %v2524
        %v2589 = vmul.f32 %v2387, %v2525
        %v2590 = vmul.f32 %v2390, %v2526
        %v2591 = vmul.f32 %v2393, %v2527
        %v2592 = vmul.f32 %v2396, %v2528
        %v2593 = vmul.f32 %v2399, %v2529
        %v2594 = vmul.f32 %v2402, %v2530
        %v2595 = vmul.f32 %v2405, %v2531
        %v2596 = vmul.f32 %v2408, %v2532
        %v2597 = vmul.f32 %v2411, %v2533
        %v2598 = vmul.f32 %v2414, %v2534
        %v2599 = vmul.f32 %v2417, %v2535
        %v2600 = vmul.f32 %v2420, %v2536
        %v2601 = vmul.f32 %v2423, %v2537
        %v2602 = vmul.f32 %v2426, %v2538
        %v2603 = vmul.f32 %v2429, %v2539
        %v2604 = vmul.f32 %v2432, %v2540
        %v2605 = vmul.f32 %v2435, %v2541
        %v2606 = vmul.f32 %v2438, %v2542
        %v2607 = vmul.f32 %v2441, %v2543
        %v2608 = vmul.f32 %v2444, %v2544
        %v2609 = vmul.f32 %v2447, %v2545
        %v2610 = vmul.f32 %v2450, %v2546
        %v2611 = vmul.f32 %v2453, %v2547
        %v2612 = vmul.f32 %v2456, %v2548
        %v2613 = vmul.f32 %v2459, %v2549
        %v2614 = vmul.f32 %v2462, %v2550
        %v2615 = vmul.f32 %v2465, %v2551
        %v2616 = vmul.f32 %v2468, %v2552
        %v2617 = vmul.f32 %v2471, %v2553
        %v2618 = vmul.f32 %v2474, %v2554
        %v2619 = vmul.f32 %v2477, %v2555
        %v2620 = vmul.f32 %v2480, %v2556
        %v2621 = vmul.f32 %v2483, %v2557
        %v2622 = vmul.f32 %v2486, %v2558
        %v2623 = vmul.f32 %v2489, %v2559
        %v2624 = vmul.f32 %v2492, %v2560
        %v2625 = vmul.f32 %v2495, %v2561
        %v2626 = vmul.f32 %v2498, %v2562
        %v2627 = vsub.f32 2.0, %v2563
        %v2628 = vsub.f32 2.0, %v2564
        %v2629 = vsub.f32 2.0, %v2565
        %v2630 = vsub.f32 2.0, %v2566
        %v2631 = vsub.f32 2.0, %v2567
        %v2632 = vsub.f32 2.0, %v2568
        %v2633 = vsub.f32 2.0, %v2569
        %v2634 = vsub.f32 2.0, %v2570
        %v2635 = vsub.f32 2.0, %v2571
        %v2636 = vsub.f32 2.0, %v2572
        %v2637 = vsub.f32 2.0, %v2573
        %v2638 = vsub.f32 2.0, %v2574
        %v2639 = vsub.f32 2.0, %v2575
        %v2640 = vsub.f32 2.0, %v2576
        %v2641 = vsub.f32 2.0, %v2577
        %v2642 = vsub.f32 2.0, %v2578
        %v2643 = vsub.f32 2.0, %v2579
        %v2644 = vsub.f32 2.0, %v2580
        %v2645 = vsub.f32 2.0, %v2581
        %v2646 = vsub.f32 2.0, %v2582
        %v2647 = vsub.f32 2.0, %v2583
        %v2648 = vsub.f32 2.0, %v2584
        %v2649 = vsub.f32 2.0, %v2585
        %v2650 = vsub.f32 2.0, %v2586
        %v2651 = vsub.f32 2.0, %v2587
        %v2652 = vsub.f32 2.0, %v2588
        %v2653 = vsub.f32 2.0, %v2589
        %v2654 = vsub.f32 2.0, %v2590
        %v2655 = vsub.f32 2.0, %v2591
        %v2656 = vsub.f32 2.0, %v2592
        %v2657 = vsub.f32 2.0, %v2593
        %v2658 = vsub.f32 2.0, %v2594
        %v2659 = vsub.f32 2.0, %v2595
        %v2660 = vsub.f32 2.0, %v2596
        %v2661 = vsub.f32 2.0, %v2597
        %v2662 = vsub.f32 2.0, %v2598
        %v2663 = vsub.f32 2.0, %v2599
        %v2664 = vsub.f32 2.0, %v2600
        %v2665 = vsub.f32 2.0, %v2601
        %v2666 = vsub.f32 2.0, %v2602
        %v2667 = vsub.f32 2.0, %v2603
        %v2668 = vsub.f32 2.0, %v2604
        %v2669 = vsub.f32 2.0, %v2605
        %v2670 = vsub.f32 2.0, %v2606
        %v2671 = vsub.f32 2.0, %v2607
        %v2672 = vsub.f32 2.0, %v2608
        %v2673 = vsub.f32 2.0, %v2609
        %v2674 = vsub.f32 2.0, %v2610
        %v2675 = vsub.f32 2.0, %v2611
        %v2676 = vsub.f32 2.0, %v2612
        %v2677 = vsub.f32 2.0, %v2613
        %v2678 = vsub.f32 2.0, %v2614
        %v2679 = vsub.f32 2.0, %v2615
        %v2680 = vsub.f32 2.0, %v2616
        %v2681 = vsub.f32 2.0, %v2617
        %v2682 = vsub.f32 2.0, %v2618
        %v2683 = vsub.f32 2.0, %v2619
        %v2684 = vsub.f32 2.0, %v2620
        %v2685 = vsub.f32 2.0, %v2621
        %v2686 = vsub.f32 2.0, %v2622
        %v2687 = vsub.f32 2.0, %v2623
        %v2688 = vsub.f32 2.0, %v2624
        %v2689 = vsub.f32 2.0, %v2625
        %v2690 = vsub.f32 2.0, %v2626
        %v2691 = vmul.f32 %v2499, %v2627
        %v2692 = vmul.f32 %v2500, %v2628
        %v2693 = vmul.f32 %v2501, %v2629
        %v2694 = vmul.f32 %v2502, %v2630
        %v2695 = vmul.f32 %v2503, %v2631
        %v2696 = vmul.f32 %v2504, %v2632
        %v2697 = vmul.f32 %v2505, %v2633
        %v2698 = vmul.f32 %v2506, %v2634
        %v2699 = vmul.f32 %v2507, %v2635
        %v2700 = vmul.f32 %v2508, %v2636
        %v2701 = vmul.f32 %v2509, %v2637
        %v2702 = vmul.f32 %v2510, %v2638
        %v2703 = vmul.f32 %v2511, %v2639
        %v2704 = vmul.f32 %v2512, %v2640
        %v2705 = vmul.f32 %v2513, %v2641
        %v2706 = vmul.f32 %v2514, %v2642
        %v2707 = vmul.f32 %v2515, %v2643
        %v2708 = vmul.f32 %v2516, %v2644
        %v2709 = vmul.f32 %v2517, %v2645
        %v2710 = vmul.f32 %v2518, %v2646
        %v2711 = vmul.f32 %v2519, %v2647
        %v2712 = vmul.f32 %v2520, %v2648
        %v2713 = vmul.f32 %v2521, %v2649
        %v2714 = vmul.f32 %v2522, %v2650
        %v2715 = vmul.f32 %v2523, %v2651
        %v2716 = vmul.f32 %v2524, %v2652
        %v2717 = vmul.f32 %v2525, %v2653
        %v2718 = vmul.f32 %v2526, %v2654
        %v2719 = vmul.f32 %v2527, %v2655
        %v2720 = vmul.f32 %v2528, %v2656
        %v2721 = vmul.f32 %v2529, %v2657
        %v2722 = vmul.f32 %v2530, %v2658
        %v2723 = vmul.f32 %v2531, %v2659
        %v2724 = vmul.f32 %v2532, %v2660
        %v2725 = vmul.f32 %v2533, %v2661
        %v2726 = vmul.f32 %v2534, %v2662
        %v2727 = vmul.f32 %v2535, %v2663
        %v2728 = vmul.f32 %v2536, %v2664
        %v2729 = vmul.f32 %v2537, %v2665
        %v2730 = vmul.f32 %v2538, %v2666
        %v2731 = vmul.f32 %v2539, %v2667
        %v2732 = vmul.f32 %v2540, %v2668
        %v2733 = vmul.f32 %v2541, %v2669
        %v2734 = vmul.f32 %v2542, %v2670
        %v2735 = vmul.f32 %v2543, %v2671
        %v2736 = vmul.f32 %v2544, %v2672
        %v2737 = vmul.f32 %v2545, %v2673
        %v2738 = vmul.f32 %v2546, %v2674
        %v2739 = vmul.f32 %v2547, %v2675
        %v2740 = vmul.f32 %v2548, %v2676
        %v2741 = vmul.f32 %v2549, %v2677
        %v2742 = vmul.f32 %v2550, %v2678
        %v2743 = vmul.f32 %v2551, %v2679
        %v2744 = vmul.f32 %v2552, %v2680
        %v2745 = vmul.f32 %v2553, %v2681
        %v2746 = vmul.f32 %v2554, %v2682
        %v2747 = vmul.f32 %v2555, %v2683
        %v2748 = vmul.f32 %v2556, %v2684
        %v2749 = vmul.f32 %v2557, %v2685
        %v2750 = vmul.f32 %v2558, %v2686
        %v2751 = vmul.f32 %v2559, %v2687
        %v2752 = vmul.f32 %v2560, %v2688
        %v2753 = vmul.f32 %v2561, %v2689
        %v2754 = vmul.f32 %v2562, %v2690
        %v2755 = vmul.f32 %v1861, %v2691
        %v2756 = vmul.f32 %v1864, %v2692
        %v2757 = vmul.f32 %v1867, %v2693
        %v2758 = vmul.f32 %v1870, %v2694
        %v2759 = vmul.f32 %v1873, %v2695
        %v2760 = vmul.f32 %v1876, %v2696
        %v2761 = vmul.f32 %v1879, %v2697
        %v2762 = vmul.f32 %v1882, %v2698
        %v2763 = vmul.f32 %v1885, %v2699
        %v2764 = vmul.f32 %v1888, %v2700
        %v2765 = vmul.f32 %v1891, %v2701
        %v2766 = vmul.f32 %v1894, %v2702
        %v2767 = vmul.f32 %v1897, %v2703
        %v2768 = vmul.f32 %v1900, %v2704
        %v2769 = vmul.f32 %v1903, %v2705
        %v2770 = vmul.f32 %v1906, %v2706
        %v2771 = vmul.f32 %v1909, %v2707
        %v2772 = vmul.f32 %v1912, %v2708
        %v2773 = vmul.f32 %v1915, %v2709
        %v2774 = vmul.f32 %v1918, %v2710
        %v2775 = vmul.f32 %v1921, %v2711
        %v2776 = vmul.f32 %v1924, %v2712
        %v2777 = vmul.f32 %v1927, %v2713
        %v2778 = vmul.f32 %v1930, %v2714
        %v2779 = vmul.f32 %v1933, %v2715
        %v2780 = vmul.f32 %v1936, %v2716
        %v2781 = vmul.f32 %v1939, %v2717
        %v2782 = vmul.f32 %v1942, %v2718
        %v2783 = vmul.f32 %v1945, %v2719
        %v2784 = vmul.f32 %v1948, %v2720
        %v2785 = vmul.f32 %v1951, %v2721
        %v2786 = vmul.f32 %v1954, %v2722
        %v2787 = vmul.f32 %v1957, %v2723
        %v2788 = vmul.f32 %v1960, %v2724
        %v2789 = vmul.f32 %v1963, %v2725
        %v2790 = vmul.f32 %v1966, %v2726
        %v2791 = vmul.f32 %v1969, %v2727
        %v2792 = vmul.f32 %v1972, %v2728
        %v2793 = vmul.f32 %v1975, %v2729
        %v2794 = vmul.f32 %v1978, %v2730
        %v2795 = vmul.f32 %v1981, %v2731
        %v2796 = vmul.f32 %v1984, %v2732
        %v2797 = vmul.f32 %v1987, %v2733
        %v2798 = vmul.f32 %v1990, %v2734
        %v2799 = vmul.f32 %v1993, %v2735
        %v2800 = vmul.f32 %v1996, %v2736
        %v2801 = vmul.f32 %v1999, %v2737
        %v2802 = vmul.f32 %v2002, %v2738
        %v2803 = vmul.f32 %v2005, %v2739
        %v2804 = vmul.f32 %v2008, %v2740
        %v2805 = vmul.f32 %v2011, %v2741
        %v2806 = vmul.f32 %v2014, %v2742
        %v2807 = vmul.f32 %v2017, %v2743
        %v2808 = vmul.f32 %v2020, %v2744
        %v2809 = vmul.f32 %v2023, %v2745
        %v2810 = vmul.f32 %v2026, %v2746
        %v2811 = vmul.f32 %v2029, %v2747
        %v2812 = vmul.f32 %v2032, %v2748
        %v2813 = vmul.f32 %v2035, %v2749
        %v2814 = vmul.f32 %v2038, %v2750
        %v2815 = vmul.f32 %v2041, %v2751
        %v2816 = vmul.f32 %v2044, %v2752
        %v2817 = vmul.f32 %v2047, %v2753
        %v2818 = vmul.f32 %v2050, %v2754
        %v2819 = vld [vmem:[#allocation7] sm:$0xff]
        %v2820 = vld [vmem:[#allocation7 + $0x8] sm:$0xff]
        %v2821 = vld [vmem:[#allocation7 + $0x10] sm:$0xff]
        %v2822 = vld [vmem:[#allocation7 + $0x18] sm:$0xff]
        %v2823 = vld [vmem:[#allocation7 + $0x20] sm:$0xff]
        %v2824 = vld [vmem:[#allocation7 + $0x28] sm:$0xff]
        %v2825 = vld [vmem:[#allocation7 + $0x30] sm:$0xff]
        %v2826 = vld [vmem:[#allocation7 + $0x38] sm:$0xff]
        %v2827 = vld [vmem:[%s4] sm:$0x3]
        %v2829 = vlaneseq
        %v2830 = vshrl.u32 %v2829, 7
        %v2831 = vsub.s32 0, %v2830
        %v2832 = vrot.slane %v2827, %v2831
        %v2833 = vlaneseq
        %v2834 = vshrl.u32 %v2833, 7
        %v2835 = vsub.s32 1, %v2834
        %v2836 = vrot.slane %v2827, %v2835
        %v2903 = vlaneseq
        %v2904 = vand.u32 %v2903, 127
        %v2905 = vlaneseq
        %v2906 = vshrl.u32 %v2905, 7
        %v2907 = vsub.s32 %v2904, %v2906
        %v2908 = vrot.slane %v2755, %v2907
        %v2909 = vadd.s32 %v2904, 4294967288
        %v2910 = vlaneseq
        %v2911 = vshrl.u32 %v2910, 7
        %v2912 = vsub.s32 %v2909, %v2911
        %v2913 = vrot.slane %v2756, %v2912
        %vm2914 = vcmask 130112
        %v2915 = vsel %vm2914, %v2913, %v2908
        %v2916 = vadd.s32 %v2904, 4294967280
        %v2917 = vlaneseq
        %v2918 = vshrl.u32 %v2917, 7
        %v2919 = vsub.s32 %v2916, %v2918
        %v2920 = vrot.slane %v2757, %v2919
        %vm2921 = vcmask 195712
        %v2922 = vsel %vm2921, %v2920, %v2915
        %v2923 = vadd.s32 %v2904, 4294967272
        %v2924 = vlaneseq
        %v2925 = vshrl.u32 %v2924, 7
        %v2926 = vsub.s32 %v2923, %v2925
        %v2927 = vrot.slane %v2758, %v2926
        %vm2928 = vcmask 261312
        %v2929 = vsel %vm2928, %v2927, %v2922
        %v2930 = vlaneseq
        %v2931 = vshrl.u32 %v2930, 7
        %v2932 = vsub.s32 %v2904, %v2931
        %v2933 = vrot.slane %v2759, %v2932
        %v2934 = vlaneseq
        %v2935 = vshrl.u32 %v2934, 7
        %v2936 = vsub.s32 %v2909, %v2935
        %v2937 = vrot.slane %v2760, %v2936
        %v2938 = vsel %vm2914, %v2937, %v2933
        %v2939 = vlaneseq
        %v2940 = vshrl.u32 %v2939, 7
        %v2941 = vsub.s32 %v2916, %v2940
        %v2942 = vrot.slane %v2761, %v2941
        %v2943 = vsel %vm2921, %v2942, %v2938
        %v2944 = vlaneseq
        %v2945 = vshrl.u32 %v2944, 7
        %v2946 = vsub.s32 %v2923, %v2945
        %v2947 = vrot.slane %v2762, %v2946
        %v2948 = vsel %vm2928, %v2947, %v2943
        %v2949 = vlaneseq
        %v2950 = vshrl.u32 %v2949, 7
        %v2951 = vsub.s32 %v2904, %v2950
        %v2952 = vrot.slane %v2763, %v2951
        %v2953 = vlaneseq
        %v2954 = vshrl.u32 %v2953, 7
        %v2955 = vsub.s32 %v2909, %v2954
        %v2956 = vrot.slane %v2764, %v2955
        %v2957 = vsel %vm2914, %v2956, %v2952
        %v2958 = vlaneseq
        %v2959 = vshrl.u32 %v2958, 7
        %v2960 = vsub.s32 %v2916, %v2959
        %v2961 = vrot.slane %v2765, %v2960
        %v2962 = vsel %vm2921, %v2961, %v2957
        %v2963 = vlaneseq
        %v2964 = vshrl.u32 %v2963, 7
        %v2965 = vsub.s32 %v2923, %v2964
        %v2966 = vrot.slane %v2766, %v2965
        %v2967 = vsel %vm2928, %v2966, %v2962
        %v2968 = vlaneseq
        %v2969 = vshrl.u32 %v2968, 7
        %v2970 = vsub.s32 %v2904, %v2969
        %v2971 = vrot.slane %v2767, %v2970
        %v2972 = vlaneseq
        %v2973 = vshrl.u32 %v2972, 7
        %v2974 = vsub.s32 %v2909, %v2973
        %v2975 = vrot.slane %v2768, %v2974
        %v2976 = vsel %vm2914, %v2975, %v2971
        %v2977 = vlaneseq
        %v2978 = vshrl.u32 %v2977, 7
        %v2979 = vsub.s32 %v2916, %v2978
        %v2980 = vrot.slane %v2769, %v2979
        %v2981 = vsel %vm2921, %v2980, %v2976
        %v2982 = vlaneseq
        %v2983 = vshrl.u32 %v2982, 7
        %v2984 = vsub.s32 %v2923, %v2983
        %v2985 = vrot.slane %v2770, %v2984
        %v2986 = vsel %vm2928, %v2985, %v2981
        %v2987 = vlaneseq
        %v2988 = vshrl.u32 %v2987, 7
        %v2989 = vsub.s32 %v2904, %v2988
        %v2990 = vrot.slane %v2771, %v2989
        %v2991 = vlaneseq
        %v2992 = vshrl.u32 %v2991, 7
        %v2993 = vsub.s32 %v2909, %v2992
        %v2994 = vrot.slane %v2772, %v2993
        %v2995 = vsel %vm2914, %v2994, %v2990
        %v2996 = vlaneseq
        %v2997 = vshrl.u32 %v2996, 7
        %v2998 = vsub.s32 %v2916, %v2997
        %v2999 = vrot.slane %v2773, %v2998
        %v3000 = vsel %vm2921, %v2999, %v2995
        %v3001 = vlaneseq
        %v3002 = vshrl.u32 %v3001, 7
        %v3003 = vsub.s32 %v2923, %v3002
        %v3004 = vrot.slane %v2774, %v3003
        %v3005 = vsel %vm2928, %v3004, %v3000
        %v3006 = vlaneseq
        %v3007 = vshrl.u32 %v3006, 7
        %v3008 = vsub.s32 %v2904, %v3007
        %v3009 = vrot.slane %v2775, %v3008
        %v3010 = vlaneseq
        %v3011 = vshrl.u32 %v3010, 7
        %v3012 = vsub.s32 %v2909, %v3011
        %v3013 = vrot.slane %v2776, %v3012
        %v3014 = vsel %vm2914, %v3013, %v3009
        %v3015 = vlaneseq
        %v3016 = vshrl.u32 %v3015, 7
        %v3017 = vsub.s32 %v2916, %v3016
        %v3018 = vrot.slane %v2777, %v3017
        %v3019 = vsel %vm2921, %v3018, %v3014
        %v3020 = vlaneseq
        %v3021 = vshrl.u32 %v3020, 7
        %v3022 = vsub.s32 %v2923, %v3021
        %v3023 = vrot.slane %v2778, %v3022
        %v3024 = vsel %vm2928, %v3023, %v3019
        %v3025 = vlaneseq
        %v3026 = vshrl.u32 %v3025, 7
        %v3027 = vsub.s32 %v2904, %v3026
        %v3028 = vrot.slane %v2779, %v3027
        %v3029 = vlaneseq
        %v3030 = vshrl.u32 %v3029, 7
        %v3031 = vsub.s32 %v2909, %v3030
        %v3032 = vrot.slane %v2780, %v3031
        %v3033 = vsel %vm2914, %v3032, %v3028
        %v3034 = vlaneseq
        %v3035 = vshrl.u32 %v3034, 7
        %v3036 = vsub.s32 %v2916, %v3035
        %v3037 = vrot.slane %v2781, %v3036
        %v3038 = vsel %vm2921, %v3037, %v3033
        %v3039 = vlaneseq
        %v3040 = vshrl.u32 %v3039, 7
        %v3041 = vsub.s32 %v2923, %v3040
        %v3042 = vrot.slane %v2782, %v3041
        %v3043 = vsel %vm2928, %v3042, %v3038
        %v3044 = vlaneseq
        %v3045 = vshrl.u32 %v3044, 7
        %v3046 = vsub.s32 %v2904, %v3045
        %v3047 = vrot.slane %v2783, %v3046
        %v3048 = vlaneseq
        %v3049 = vshrl.u32 %v3048, 7
        %v3050 = vsub.s32 %v2909, %v3049
        %v3051 = vrot.slane %v2784, %v3050
        %v3052 = vsel %vm2914, %v3051, %v3047
        %v3053 = vlaneseq
        %v3054 = vshrl.u32 %v3053, 7
        %v3055 = vsub.s32 %v2916, %v3054
        %v3056 = vrot.slane %v2785, %v3055
        %v3057 = vsel %vm2921, %v3056, %v3052
        %v3058 = vlaneseq
        %v3059 = vshrl.u32 %v3058, 7
        %v3060 = vsub.s32 %v2923, %v3059
        %v3061 = vrot.slane %v2786, %v3060
        %v3062 = vsel %vm2928, %v3061, %v3057
        %v3063 = vlaneseq
        %v3064 = vshrl.u32 %v3063, 7
        %v3065 = vsub.s32 %v2904, %v3064
        %v3066 = vrot.slane %v2787, %v3065
        %v3067 = vlaneseq
        %v3068 = vshrl.u32 %v3067, 7
        %v3069 = vsub.s32 %v2909, %v3068
        %v3070 = vrot.slane %v2788, %v3069
        %v3071 = vsel %vm2914, %v3070, %v3066
        %v3072 = vlaneseq
        %v3073 = vshrl.u32 %v3072, 7
        %v3074 = vsub.s32 %v2916, %v3073
        %v3075 = vrot.slane %v2789, %v3074
        %v3076 = vsel %vm2921, %v3075, %v3071
        %v3077 = vlaneseq
        %v3078 = vshrl.u32 %v3077, 7
        %v3079 = vsub.s32 %v2923, %v3078
        %v3080 = vrot.slane %v2790, %v3079
        %v3081 = vsel %vm2928, %v3080, %v3076
        %v3082 = vlaneseq
        %v3083 = vshrl.u32 %v3082, 7
        %v3084 = vsub.s32 %v2904, %v3083
        %v3085 = vrot.slane %v2791, %v3084
        %v3086 = vlaneseq
        %v3087 = vshrl.u32 %v3086, 7
        %v3088 = vsub.s32 %v2909, %v3087
        %v3089 = vrot.slane %v2792, %v3088
        %v3090 = vsel %vm2914, %v3089, %v3085
        %v3091 = vlaneseq
        %v3092 = vshrl.u32 %v3091, 7
        %v3093 = vsub.s32 %v2916, %v3092
        %v3094 = vrot.slane %v2793, %v3093
        %v3095 = vsel %vm2921, %v3094, %v3090
        %v3096 = vlaneseq
        %v3097 = vshrl.u32 %v3096, 7
        %v3098 = vsub.s32 %v2923, %v3097
        %v3099 = vrot.slane %v2794, %v3098
        %v3100 = vsel %vm2928, %v3099, %v3095
        %v3101 = vlaneseq
        %v3102 = vshrl.u32 %v3101, 7
        %v3103 = vsub.s32 %v2904, %v3102
        %v3104 = vrot.slane %v2795, %v3103
        %v3105 = vlaneseq
        %v3106 = vshrl.u32 %v3105, 7
        %v3107 = vsub.s32 %v2909, %v3106
        %v3108 = vrot.slane %v2796, %v3107
        %v3109 = vsel %vm2914, %v3108, %v3104
        %v3110 = vlaneseq
        %v3111 = vshrl.u32 %v3110, 7
        %v3112 = vsub.s32 %v2916, %v3111
        %v3113 = vrot.slane %v2797, %v3112
        %v3114 = vsel %vm2921, %v3113, %v3109
        %v3115 = vlaneseq
        %v3116 = vshrl.u32 %v3115, 7
        %v3117 = vsub.s32 %v2923, %v3116
        %v3118 = vrot.slane %v2798, %v3117
        %v3119 = vsel %vm2928, %v3118, %v3114
        %v3120 = vlaneseq
        %v3121 = vshrl.u32 %v3120, 7
        %v3122 = vsub.s32 %v2904, %v3121
        %v3123 = vrot.slane %v2799, %v3122
        %v3124 = vlaneseq
        %v3125 = vshrl.u32 %v3124, 7
        %v3126 = vsub.s32 %v2909, %v3125
        %v3127 = vrot.slane %v2800, %v3126
        %v3128 = vsel %vm2914, %v3127, %v3123
        %v3129 = vlaneseq
        %v3130 = vshrl.u32 %v3129, 7
        %v3131 = vsub.s32 %v2916, %v3130
        %v3132 = vrot.slane %v2801, %v3131
        %v3133 = vsel %vm2921, %v3132, %v3128
        %v3134 = vlaneseq
        %v3135 = vshrl.u32 %v3134, 7
        %v3136 = vsub.s32 %v2923, %v3135
        %v3137 = vrot.slane %v2802, %v3136
        %v3138 = vsel %vm2928, %v3137, %v3133
        %v3139 = vlaneseq
        %v3140 = vshrl.u32 %v3139, 7
        %v3141 = vsub.s32 %v2904, %v3140
        %v3142 = vrot.slane %v2803, %v3141
        %v3143 = vlaneseq
        %v3144 = vshrl.u32 %v3143, 7
        %v3145 = vsub.s32 %v2909, %v3144
        %v3146 = vrot.slane %v2804, %v3145
        %v3147 = vsel %vm2914, %v3146, %v3142
        %v3148 = vlaneseq
        %v3149 = vshrl.u32 %v3148, 7
        %v3150 = vsub.s32 %v2916, %v3149
        %v3151 = vrot.slane %v2805, %v3150
        %v3152 = vsel %vm2921, %v3151, %v3147
        %v3153 = vlaneseq
        %v3154 = vshrl.u32 %v3153, 7
        %v3155 = vsub.s32 %v2923, %v3154
        %v3156 = vrot.slane %v2806, %v3155
        %v3157 = vsel %vm2928, %v3156, %v3152
        %v3158 = vlaneseq
        %v3159 = vshrl.u32 %v3158, 7
        %v3160 = vsub.s32 %v2904, %v3159
        %v3161 = vrot.slane %v2807, %v3160
        %v3162 = vlaneseq
        %v3163 = vshrl.u32 %v3162, 7
        %v3164 = vsub.s32 %v2909, %v3163
        %v3165 = vrot.slane %v2808, %v3164
        %v3166 = vsel %vm2914, %v3165, %v3161
        %v3167 = vlaneseq
        %v3168 = vshrl.u32 %v3167, 7
        %v3169 = vsub.s32 %v2916, %v3168
        %v3170 = vrot.slane %v2809, %v3169
        %v3171 = vsel %vm2921, %v3170, %v3166
        %v3172 = vlaneseq
        %v3173 = vshrl.u32 %v3172, 7
        %v3174 = vsub.s32 %v2923, %v3173
        %v3175 = vrot.slane %v2810, %v3174
        %v3176 = vsel %vm2928, %v3175, %v3171
        %v3177 = vlaneseq
        %v3178 = vshrl.u32 %v3177, 7
        %v3179 = vsub.s32 %v2904, %v3178
        %v3180 = vrot.slane %v2811, %v3179
        %v3181 = vlaneseq
        %v3182 = vshrl.u32 %v3181, 7
        %v3183 = vsub.s32 %v2909, %v3182
        %v3184 = vrot.slane %v2812, %v3183
        %v3185 = vsel %vm2914, %v3184, %v3180
        %v3186 = vlaneseq
        %v3187 = vshrl.u32 %v3186, 7
        %v3188 = vsub.s32 %v2916, %v3187
        %v3189 = vrot.slane %v2813, %v3188
        %v3190 = vsel %vm2921, %v3189, %v3185
        %v3191 = vlaneseq
        %v3192 = vshrl.u32 %v3191, 7
        %v3193 = vsub.s32 %v2923, %v3192
        %v3194 = vrot.slane %v2814, %v3193
        %v3195 = vsel %vm2928, %v3194, %v3190
        %v3196 = vlaneseq
        %v3197 = vshrl.u32 %v3196, 7
        %v3198 = vsub.s32 %v2904, %v3197
        %v3199 = vrot.slane %v2815, %v3198
        %v3200 = vlaneseq
        %v3201 = vshrl.u32 %v3200, 7
        %v3202 = vsub.s32 %v2909, %v3201
        %v3203 = vrot.slane %v2816, %v3202
        %v3204 = vsel %vm2914, %v3203, %v3199
        %v3205 = vlaneseq
        %v3206 = vshrl.u32 %v3205, 7
        %v3207 = vsub.s32 %v2916, %v3206
        %v3208 = vrot.slane %v2817, %v3207
        %v3209 = vsel %vm2921, %v3208, %v3204
        %v3210 = vlaneseq
        %v3211 = vshrl.u32 %v3210, 7
        %v3212 = vsub.s32 %v2923, %v3211
        %v3213 = vrot.slane %v2818, %v3212
        %v3214 = vsel %vm2928, %v3213, %v3209
        %vm3215 = vcmask 1041409
        %v3216 = vsel %vm3215, %v2948, %v2929
        %vm3217 = vcmask 1042434
        %v3218 = vsel %vm3217, %v2967, %v3216
        %vm3219 = vcmask 1043459
        %v3220 = vsel %vm3219, %v2986, %v3218
        %vm3221 = vcmask 1044484
        %v3222 = vsel %vm3221, %v3005, %v3220
        %vm3223 = vcmask 1045509
        %v3224 = vsel %vm3223, %v3024, %v3222
        %vm3225 = vcmask 1046534
        %v3226 = vsel %vm3225, %v3043, %v3224
        %vm3227 = vcmask 1047559
        %v3228 = vsel %vm3227, %v3062, %v3226
        %v3229 = vsel %vm3215, %v3100, %v3081
        %v3230 = vsel %vm3217, %v3119, %v3229
        %v3231 = vsel %vm3219, %v3138, %v3230
        %v3232 = vsel %vm3221, %v3157, %v3231
        %v3233 = vsel %vm3223, %v3176, %v3232
        %v3234 = vsel %vm3225, %v3195, %v3233
        %v3235 = vsel %vm3227, %v3214, %v3234
        %v3236 = vsel %vm1858, %v3228, 0
        %v3238 = vsel %vm1858, %v3235, 0
        %3240 = vmatprep.subr.mxu0 0.0
        %3241 = vmatpush1.msra.mxu0 0.0
        %3242 = vmatprep.subr.mxu0 0.0
        %3243 = vmatpush1.msra.mxu0 0.0
        %3244 = vmatprep.subr.mxu0 0.0
        %3245 = vmatpush1.msra.mxu0 0.0
        %3246 = vmatprep.subr.mxu0 0.0
        %3247 = vmatpush1.msra.mxu0 0.0
        %3248 = vmatprep.subr.mxu0 0.0
        %3249 = vmatpush1.msra.mxu0 0.0
        %3250 = vmatprep.subr.mxu0 0.0
        %3251 = vmatpush1.msra.mxu0 0.0
        %3252 = vmatprep.subr.mxu0 0.0
        %3253 = vmatpush1.msra.mxu0 0.0
        %3254 = vmatprep.subr.mxu0 0.0
        %3255 = vmatpush1.msra.mxu0 0.0
        %3256 = vmatprep.subr.mxu0 0.0
        %3257 = vmatpush1.msra.mxu0 0.0
        %3258 = vmatprep.subr.mxu0 0.0
        %3259 = vmatpush1.msra.mxu0 0.0
        %3260 = vmatprep.subr.mxu0 0.0
        %3261 = vmatpush1.msra.mxu0 0.0
        %3262 = vmatprep.subr.mxu0 0.0
        %3263 = vmatpush1.msra.mxu0 0.0
        %3264 = vmatprep.subr.mxu0 %v2826
        %3265 = vmatpush1.msra.mxu0 %v2825
        %3266 = vmatprep.subr.mxu0 %v2824
        %3267 = vmatpush1.msra.mxu0 %v2823
        %3268 = vmatprep.subr.mxu0 %v2822
        %3269 = vmatpush1.msra.mxu0 %v2821
        %3270 = vmatprep.subr.mxu0 %v2820
        %3271 = vmatpush1.msra.mxu0 %v2819
        %3272 = vmatprep.subr.mxu0 0.0
        %3273 = vmatpush2.msra.mxu0 0.0
        %3274 = vmatprep.subr.mxu0 0.0
        %3275 = vmatpush2.msra.mxu0 0.0
        %3276 = vmatprep.subr.mxu0 0.0
        %3277 = vmatpush2.msra.mxu0 0.0
        %3278 = vmatprep.subr.mxu0 0.0
        %3279 = vmatpush2.msra.mxu0 0.0
        %3280 = vmatprep.subr.mxu0 0.0
        %3281 = vmatpush2.msra.mxu0 0.0
        %3282 = vmatprep.subr.mxu0 0.0
        %3283 = vmatpush2.msra.mxu0 0.0
        %3284 = vmatprep.subr.mxu0 0.0
        %3285 = vmatpush2.msra.mxu0 0.0
        %3286 = vmatprep.subr.mxu0 0.0
        %3287 = vmatpush2.msra.mxu0 0.0
        %3288 = vmatprep.subr.mxu0 0.0
        %3289 = vmatpush2.msra.mxu0 0.0
        %3290 = vmatprep.subr.mxu0 0.0
        %3291 = vmatpush2.msra.mxu0 0.0
        %3292 = vmatprep.subr.mxu0 0.0
        %3293 = vmatpush2.msra.mxu0 0.0
        %3294 = vmatprep.subr.mxu0 0.0
        %3295 = vmatpush2.msra.mxu0 0.0
        %3296 = vmatprep.subr.mxu0 0.0
        %3297 = vmatpush2.msra.mxu0 0.0
        %3298 = vmatprep.subr.mxu0 0.0
        %3299 = vmatpush2.msra.mxu0 0.0
        %3300 = vmatprep.subr.mxu0 0.0
        %3301 = vmatpush2.msra.mxu0 0.0
        %3302 = vmatprep.subr.mxu0 0.0
        %3303 = vmatpush2.msra.mxu0 0.0
        %3304 = vmatprep.mubr.f32.mxu0 0.0
        %3305 = vmatmul.mubr.f32.gmra.mxu0 %v3236
        %v3306 = vpop.f32.mrf.mxu0
        %v3307 = vadd.f32 %v2832, %v3306
        %v3308 = vpop.f32.mrf.mxu0
        %v3309 = vadd.f32 %v2836, %v3308
        %3310 = vmatprep.mubr.f32.mxu0 0.0
        %3311 = vmatmul.mubr.f32.gmra.mxu0 %v3238
        %v3312 = vpop.f32.mrf.mxu0
        %v3313 = vadd.f32 %v2832, %v3312
        %v3314 = vpop.f32.mrf.mxu0
        %v3315 = vadd.f32 %v2836, %v3314
        %3316 = vdwg.mxu0
        %v3317 = vadd.f32 %v3307, %v275
        %v3318 = vadd.f32 %v3309, %v276
        %v3319 = vadd.f32 %v3313, %v277
        %v3320 = vadd.f32 %v3315, %v278
        %3321 = vst [vmem:[%s272] sm:$0xff] %v3317
        %3322 = vst [vmem:[%s272 + $0x8] sm:$0xff] %v3318
        %3323 = vst [vmem:[%s272 + $0x10] sm:$0xff] %v3319
        %3324 = vst [vmem:[%s272 + $0x18] sm:$0xff] %v3320
        %s3325 = sand.u32 %s141, 1
        %s3326 = scalar_lea.sflag [#allocation4], %s3325
        %s3327 = sand.u32 %s141, 1
        %s3328 = smul.addr %s3327, 32
        %s3329 = scalar_lea.vmem [#allocation8], %s3328
        // Predicated region
        $region53: #{tpu_custom_call.1} parent=39 // pred_check
          %p3330 = pneg %p151
        $region54: #{tpu_custom_call.1} parent=39 // pred_check_branch
          %3332 = sbr.rel (%p3330) target = $region56
        $region55: #{tpu_custom_call.1} parent=39 // pred_region
          %s3333 = smul.u32 2, %s23
          %s3335 = ssub.s32 512, 512
          %3336 = vsyncadd %s3326, %s3335
          %s3337 = smul.addr %s3333, 2
          %s3338 = smul.addr %s3337, 128
          %s3339 = scalar_lea.hbm %s5, %s3338
          %s3340 = sshll.u32 %s3329, 4
          %s3341 = int_to_ptr.vmem [resolvable:$true] %s3340
          %3346 = dma.vmem_to_hbm [thread:$0]  %s3341, 512, %s3339, %s3326, 256, 256, 16
        $region56: #{tpu_custom_call.1} parent=39 // pred_fallthru
          _
      $region40: #{tpu_custom_call.1} parent=5 // pred_fallthru
        _
      %p3347 = scmp.le.s32.totalorder 2, %s18
      // Predicated region
      $region57: #{tpu_custom_call.1} parent=5 // pred_check
        %p3348 = pneg %p3347
      $region58: #{tpu_custom_call.1} parent=5 // pred_check_branch
        %3350 = sbr.rel (%p3348) target = $region60
      $region59: #{tpu_custom_call.1} parent=5 // pred_region
        %s3351 = ssub.s32 %s18, 2
        // Predicated region
        $region61: #{tpu_custom_call.1} parent=59 // pred_check
          %p3352 = pneg %p157
        $region62: #{tpu_custom_call.1} parent=59 // pred_check_branch
          %3354 = sbr.rel (%p3352) target = $region64
        $region63: #{tpu_custom_call.1} parent=59 // pred_region
          %s3355 = sand.u32 %s142, 1
          %s3356 = scalar_lea.sflag [#allocation4], %s3355
          %s3357 = sand.u32 %s142, 1
          %s3358 = smul.addr %s3357, 32
          %s3359 = scalar_lea.vmem [#allocation8], %s3358
          %3360 = dma.done %s3356, 512
        $region64: #{tpu_custom_call.1} parent=59 // pred_fallthru
          _
      $region60: #{tpu_custom_call.1} parent=5 // pred_fallthru
        _
    $region6: #{tpu_custom_call.1} parent=1 // loop_footer
      %s22 = sadd.s32 1, %s18
    $region7: #{tpu_custom_call.1} parent=1 // loop_footer_branch
      %17 = sbr.rel target = $region3
    $region8: #{tpu_custom_call.1} parent=1 // loop_exit
      _
    %3361 = vsyncpa [#allocation3], 1
    %s3362 = scalar_lea.sflag [#allocation3], 1
    %3363 = vsyncpa %s3362, 1
    %3364 = vsyncpa [#allocation6], 1
    %3365 = vsyncpa [#allocation4], 1
    %s3366 = scalar_lea.sflag [#allocation4], 1
    %3367 = vsyncpa %s3366, 1

</llo_original>
